<compile_context>
chip_gen: v6e
topology: v6e:2x2x1
jax: 0.10.0
libtpu: 0.0.40
codegen_flags: <defaults>
</compile_context>

<pallas_src>
import functools
import math

import jax
import jax.numpy as jnp
from jax.experimental import pallas as pl
from jax.experimental.pallas import tpu as pltpu  # noqa: F401

# ---- small config consistent with the module's forward (hidden, labels) ----
BATCH = 2
SEQ = 8
HIDDEN = 32          # stands in for hidden_size=768
NUM_HEADS = 2
HEAD_DIM = HIDDEN // NUM_HEADS
FFN = 4 * HIDDEN
LAYERS = 2
VOCAB = 128
LABELS = 2
MAX_POS = 64
LN_EPS = 1e-12


# ----------------------------- in-kernel helpers ----------------------------
def _layernorm(x, g, b):
    """f32 LayerNorm over the last (lane) axis; used as a matmul epilogue."""
    mu = jnp.mean(x, axis=-1, keepdims=True)
    var = jnp.mean(jnp.square(x - mu), axis=-1, keepdims=True)
    return (x - mu) * jax.lax.rsqrt(var + LN_EPS) * g + b


# ----------------------------- Pallas kernels ------------------------------
def _emb_ln_kernel(x_ref, g_ref, b_ref, o_ref):
    o_ref[...] = _layernorm(x_ref[...], g_ref[...], b_ref[...])


def emb_layer_norm(x, g, b):
    return pl.pallas_call(
        _emb_ln_kernel,
        out_shape=jax.ShapeDtypeStruct(x.shape, jnp.float32),
    )(x, g, b)


def _encoder_layer_kernel(h_ref, bias_ref,
                          wqkv_ref, bqkv_ref, wo_ref, bo_ref,
                          ln1g_ref, ln1b_ref,
                          wi_ref, bi_ref, wf_ref, bf_ref,
                          ln2g_ref, ln2b_ref,
                          o_ref):
    """Whole BERT encoder layer in one kernel; activations stay in VMEM."""
    h = h_ref[...]                                     # (B*S, H) f32

    # ---- fused QKV projection: bf16 MXU matmul, f32 accumulate ----
    qkv = jnp.dot(h.astype(jnp.bfloat16), wqkv_ref[...],
                  preferred_element_type=jnp.float32) + bqkv_ref[...]
    q = qkv[:, 0 * HIDDEN:1 * HIDDEN].reshape(BATCH, SEQ, HIDDEN)
    k = qkv[:, 1 * HIDDEN:2 * HIDDEN].reshape(BATCH, SEQ, HIDDEN)
    v = qkv[:, 2 * HIDDEN:3 * HIDDEN].reshape(BATCH, SEQ, HIDDEN)

    bias = bias_ref[...]                               # (B, 1, S) additive mask
    scale = jnp.float32(1.0 / math.sqrt(HEAD_DIM))

    # Batched (over B) attention; tiny static loop over the 2 heads.
    ctx_heads = []
    for hd in range(NUM_HEADS):
        lo = hd * HEAD_DIM
        qh = q[:, :, lo:lo + HEAD_DIM].astype(jnp.bfloat16)
        kh = k[:, :, lo:lo + HEAD_DIM].astype(jnp.bfloat16)
        vh = v[:, :, lo:lo + HEAD_DIM].astype(jnp.bfloat16)
        s = jnp.einsum('bqd,bkd->bqk', qh, kh,
                       preferred_element_type=jnp.float32) * scale + bias
        p = jax.nn.softmax(s, axis=-1)                 # f32
        ctx_heads.append(jnp.einsum('bqk,bkd->bqd', p.astype(jnp.bfloat16), vh,
                                    preferred_element_type=jnp.float32))
    ctx = jnp.concatenate(ctx_heads, axis=-1).reshape(BATCH * SEQ, HIDDEN)

    # ---- attention output projection + residual + LayerNorm (epilogue) ----
    attn = jnp.dot(ctx.astype(jnp.bfloat16), wo_ref[...],
                   preferred_element_type=jnp.float32) + bo_ref[...]
    h1 = _layernorm(h + attn, ln1g_ref[...], ln1b_ref[...])

    # ---- FFN: up-proj + GELU, down-proj + residual + LayerNorm ----
    ff = jnp.dot(h1.astype(jnp.bfloat16), wi_ref[...],
                 preferred_element_type=jnp.float32) + bi_ref[...]
    # TODO(synk): HuggingFace BERT uses the exact erf GELU; tanh approximation
    # is used here (numerically close, guaranteed Mosaic lowering).
    ff = jax.nn.gelu(ff, approximate=True)
    ff = jnp.dot(ff.astype(jnp.bfloat16), wf_ref[...],
                 preferred_element_type=jnp.float32) + bf_ref[...]

    o_ref[...] = _layernorm(h1 + ff, ln2g_ref[...], ln2b_ref[...])


def encoder_layer(h2, mask_bias, lp):
    return pl.pallas_call(
        _encoder_layer_kernel,
        out_shape=jax.ShapeDtypeStruct((BATCH * SEQ, HIDDEN), jnp.float32),
    )(h2, mask_bias,
      lp["wqkv"], lp["bqkv"], lp["wo"], lp["bo"],
      lp["ln1_g"], lp["ln1_b"],
      lp["wi"], lp["bi"], lp["wf"], lp["bf"],
      lp["ln2_g"], lp["ln2_b"])


def _pooler_decoder_kernel(cls_ref, pw_ref, pb_ref, dw_ref, db_ref, o_ref):
    pooled = jnp.tanh(
        jnp.dot(cls_ref[...].astype(jnp.bfloat16), pw_ref[...],
                preferred_element_type=jnp.float32) + pb_ref[...])
    o_ref[...] = (jnp.dot(pooled.astype(jnp.bfloat16), dw_ref[...],
                          preferred_element_type=jnp.float32) + db_ref[...])


def pooler_decoder(cls, pw, pb, dw, db):
    return pl.pallas_call(
        _pooler_decoder_kernel,
        out_shape=jax.ShapeDtypeStruct((BATCH, LABELS), jnp.float32),
    )(cls, pw, pb, dw, db)


# ------------------------------- parameters --------------------------------
def init_params(key):
    keys = iter(jax.random.split(key, 64))

    def nrm(shape):
        return 0.02 * jax.random.normal(next(keys), shape, jnp.float32)

    def w16(shape):                       # matmul weights live in bf16
        return nrm(shape).astype(jnp.bfloat16)

    p = {
        "word_emb": nrm((VOCAB, HIDDEN)),
        "pos_emb": nrm((MAX_POS, HIDDEN)),
        "type_emb": nrm((2, HIDDEN)),
        "emb_ln_g": jnp.ones((1, HIDDEN), jnp.float32),
        "emb_ln_b": jnp.zeros((1, HIDDEN), jnp.float32),
        "layers": [],
        "pool_w": w16((HIDDEN, HIDDEN)),
        "pool_b": jnp.zeros((1, HIDDEN), jnp.float32),
        "dec_w": w16((HIDDEN, LABELS)),   # nn.Linear(hidden_size, labels)
        "dec_b": jnp.zeros((1, LABELS), jnp.float32),
    }
    for _ in range(LAYERS):
        p["layers"].append({
            # fused [Wq | Wk | Wv] -> one lane-dense (H, 3H) matmul
            "wqkv": w16((HIDDEN, 3 * HIDDEN)),
            "bqkv": jnp.zeros((1, 3 * HIDDEN), jnp.float32),
            "wo": w16((HIDDEN, HIDDEN)), "bo": jnp.zeros((1, HIDDEN), jnp.float32),
            "ln1_g": jnp.ones((1, HIDDEN), jnp.float32),
            "ln1_b": jnp.zeros((1, HIDDEN), jnp.float32),
            "wi": w16((HIDDEN, FFN)), "bi": jnp.zeros((1, FFN), jnp.float32),
            "wf": w16((FFN, HIDDEN)), "bf": jnp.zeros((1, HIDDEN), jnp.float32),
            "ln2_g": jnp.ones((1, HIDDEN), jnp.float32),
            "ln2_b": jnp.zeros((1, HIDDEN), jnp.float32),
        })
    return p


# ------------------------------ forward pass --------------------------------
def bert_forward(p, input_ids, attention_mask):
    # TODO(synk): the HuggingFace BertTokenizer (string -> token ids) and the
    # pretrained checkpoint have no Pallas equivalent; ids/mask are inputs and
    # weights are random.
    B, S = input_ids.shape

    # Embedding gather is plain-JAX glue; everything downstream is Pallas.
    h = (jnp.take(p["word_emb"], input_ids, axis=0)
         + p["pos_emb"][:S][None, :, :]
         + p["type_emb"][0][None, None, :])
    h2 = emb_layer_norm(h.reshape(B * S, HIDDEN), p["emb_ln_g"], p["emb_ln_b"])

    # additive mask bias: 0 where attended, -1e9 where padded; (B, 1, S)
    mask_bias = ((attention_mask.astype(jnp.float32) - 1.0) * 1e9
                 ).reshape(B, 1, S)

    for lp in p["layers"]:
        h2 = encoder_layer(h2, mask_bias, lp)          # one fused call / layer

    cls = h2.reshape(B, S, HIDDEN)[:, 0, :]            # (B, HIDDEN)
    logits = pooler_decoder(cls, p["pool_w"], p["pool_b"],
                            p["dec_w"], p["dec_b"])    # (B, LABELS)
    return logits


if __name__ == "__main__":
    key = jax.random.PRNGKey(0)
    pkey, ikey = jax.random.split(key)
    params = init_params(pkey)

    input_ids = jax.random.randint(ikey, (BATCH, SEQ), 0, VOCAB, dtype=jnp.int32)
    # second example has 2 padding tokens to exercise the attention mask
    attention_mask = jnp.array(
        [[1] * SEQ, [1] * (SEQ - 2) + [0, 0]], dtype=jnp.int32)

    fwd = jax.jit(functools.partial(bert_forward, params))
    logits = fwd(input_ids, attention_mask)
    jax.block_until_ready(logits)
    assert logits.shape == (BATCH, LABELS) and logits.dtype == jnp.float32
    print("KERNEL_OK")
</pallas_src>

<mosaic_0001>
module attributes {stable_mosaic.version = 11 : i64} {
  func.func @_emb_ln_kernel(%arg0: memref<16x32xf32, #tpu.memory_space<vmem>>, %arg1: memref<1x32xf32, #tpu.memory_space<vmem>>, %arg2: memref<1x32xf32, #tpu.memory_space<vmem>>, %arg3: memref<16x32xf32, #tpu.memory_space<vmem>>) attributes {dimension_semantics = [], scalar_prefetch = 0 : i64, scratch_operands = 0 : i64, tpu.core_type = #tpu.core_type<tc>} {
    %c0 = arith.constant 0 : index
    %c0_0 = arith.constant 0 : index
    %0 = vector.load %arg0[%c0, %c0_0] : memref<16x32xf32, #tpu.memory_space<vmem>>, vector<16x32xf32>
    %c0_1 = arith.constant 0 : index
    %c0_2 = arith.constant 0 : index
    %1 = vector.load %arg1[%c0_1, %c0_2] : memref<1x32xf32, #tpu.memory_space<vmem>>, vector<1x32xf32>
    %c0_3 = arith.constant 0 : index
    %c0_4 = arith.constant 0 : index
    %2 = vector.load %arg2[%c0_3, %c0_4] : memref<1x32xf32, #tpu.memory_space<vmem>>, vector<1x32xf32>
    %cst = arith.constant dense<0.000000e+00> : vector<16xf32>
    %3 = vector.multi_reduction <add>, %0, %cst [1] : vector<16x32xf32> to vector<16xf32>
    %4 = vector.shape_cast %3 : vector<16xf32> to vector<16x1xf32>
    %cst_5 = arith.constant 3.200000e+01 : f32
    %5 = vector.broadcast %cst_5 : f32 to vector<16x1xf32>
    %6 = arith.divf %4, %5 : vector<16x1xf32>
    %7 = vector.broadcast %6 : vector<16x1xf32> to vector<16x32xf32>
    %8 = arith.subf %0, %7 : vector<16x32xf32>
    %9 = arith.mulf %8, %8 : vector<16x32xf32>
    %cst_6 = arith.constant dense<0.000000e+00> : vector<16xf32>
    %10 = vector.multi_reduction <add>, %9, %cst_6 [1] : vector<16x32xf32> to vector<16xf32>
    %11 = vector.shape_cast %10 : vector<16xf32> to vector<16x1xf32>
    %cst_7 = arith.constant 3.200000e+01 : f32
    %12 = vector.broadcast %cst_7 : f32 to vector<16x1xf32>
    %13 = arith.divf %11, %12 : vector<16x1xf32>
    %14 = vector.broadcast %6 : vector<16x1xf32> to vector<16x32xf32>
    %15 = arith.subf %0, %14 : vector<16x32xf32>
    %cst_8 = arith.constant 9.99999996E-13 : f32
    %16 = vector.broadcast %cst_8 : f32 to vector<16x1xf32>
    %17 = arith.addf %13, %16 : vector<16x1xf32>
    %18 = math.rsqrt %17 : vector<16x1xf32>
    %19 = vector.broadcast %18 : vector<16x1xf32> to vector<16x32xf32>
    %20 = arith.mulf %15, %19 : vector<16x32xf32>
    %21 = vector.broadcast %1 : vector<1x32xf32> to vector<16x32xf32>
    %22 = arith.mulf %20, %21 : vector<16x32xf32>
    %23 = vector.broadcast %2 : vector<1x32xf32> to vector<16x32xf32>
    %24 = arith.addf %22, %23 : vector<16x32xf32>
    %c0_9 = arith.constant 0 : index
    %c0_10 = arith.constant 0 : index
    %25 = vector.load %arg3[%c0_9, %c0_10] : memref<16x32xf32, #tpu.memory_space<vmem>>, vector<16x32xf32>
    tpu.vector_store %arg3[%c0_9, %c0_10], %24 {strides = array<i32>} : memref<16x32xf32, #tpu.memory_space<vmem>>, vector<16x32xf32>,
    return
  }
}

module attributes {stable_mosaic.version = 11 : i64} {
  func.func @_pooler_decoder_kernel(%arg0: memref<2x32xf32, #tpu.memory_space<vmem>>, %arg1: memref<32x32xbf16, #tpu.memory_space<vmem>>, %arg2: memref<1x32xf32, #tpu.memory_space<vmem>>, %arg3: memref<32x2xbf16, #tpu.memory_space<vmem>>, %arg4: memref<1x2xf32, #tpu.memory_space<vmem>>, %arg5: memref<2x2xf32, #tpu.memory_space<vmem>>) attributes {dimension_semantics = [], scalar_prefetch = 0 : i64, scratch_operands = 0 : i64, tpu.core_type = #tpu.core_type<tc>} {
    %c0 = arith.constant 0 : index
    %c0_0 = arith.constant 0 : index
    %0 = vector.load %arg0[%c0, %c0_0] : memref<2x32xf32, #tpu.memory_space<vmem>>, vector<2x32xf32>
    %1 = arith.truncf %0 : vector<2x32xf32> to vector<2x32xbf16>
    %c0_1 = arith.constant 0 : index
    %c0_2 = arith.constant 0 : index
    %2 = vector.load %arg1[%c0_1, %c0_2] : memref<32x32xbf16, #tpu.memory_space<vmem>>, vector<32x32xbf16>
    %cst = arith.constant dense<0.000000e+00> : vector<2x32xf32>
    %3 = tpu.matmul %1, %2, %cst {dimension_numbers = #tpu.dot_dimension_numbers<[1], [0], [0], [1], [0, 0, 1, 1], [], []>} : vector<2x32xbf16>, vector<32x32xbf16>, vector<2x32xf32> -> vector<2x32xf32>
    %c0_3 = arith.constant 0 : index
    %c0_4 = arith.constant 0 : index
    %4 = vector.load %arg2[%c0_3, %c0_4] : memref<1x32xf32, #tpu.memory_space<vmem>>, vector<1x32xf32>
    %5 = vector.broadcast %4 : vector<1x32xf32> to vector<2x32xf32>
    %6 = arith.addf %3, %5 : vector<2x32xf32>
    %7 = math.tanh %6 : vector<2x32xf32>
    %8 = arith.truncf %7 : vector<2x32xf32> to vector<2x32xbf16>
    %c0_5 = arith.constant 0 : index
    %c0_6 = arith.constant 0 : index
    %9 = vector.load %arg3[%c0_5, %c0_6] : memref<32x2xbf16, #tpu.memory_space<vmem>>, vector<32x2xbf16>
    %cst_7 = arith.constant dense<0.000000e+00> : vector<2x2xf32>
    %10 = tpu.matmul %8, %9, %cst_7 {dimension_numbers = #tpu.dot_dimension_numbers<[1], [0], [0], [1], [0, 0, 1, 1], [], []>} : vector<2x32xbf16>, vector<32x2xbf16>, vector<2x2xf32> -> vector<2x2xf32>
    %c0_8 = arith.constant 0 : index
    %c0_9 = arith.constant 0 : index
    %11 = vector.load %arg4[%c0_8, %c0_9] : memref<1x2xf32, #tpu.memory_space<vmem>>, vector<1x2xf32>
    %12 = vector.broadcast %11 : vector<1x2xf32> to vector<2x2xf32>
    %13 = arith.addf %10, %12 : vector<2x2xf32>
    %c0_10 = arith.constant 0 : index
    %c0_11 = arith.constant 0 : index
    %14 = vector.load %arg5[%c0_10, %c0_11] : memref<2x2xf32, #tpu.memory_space<vmem>>, vector<2x2xf32>
    tpu.vector_store %arg5[%c0_10, %c0_11], %13 {strides = array<i32>} : memref<2x2xf32, #tpu.memory_space<vmem>>, vector<2x2xf32>,
    return
  }
}

module attributes {stable_mosaic.version = 11 : i64} {
  func.func @_encoder_layer_kernel(%arg0: memref<16x32xf32, #tpu.memory_space<vmem>>, %arg1: memref<2x1x8xf32, #tpu.memory_space<vmem>>, %arg2: memref<32x96xbf16, #tpu.memory_space<vmem>>, %arg3: memref<1x96xf32, #tpu.memory_space<vmem>>, %arg4: memref<32x32xbf16, #tpu.memory_space<vmem>>, %arg5: memref<1x32xf32, #tpu.memory_space<vmem>>, %arg6: memref<1x32xf32, #tpu.memory_space<vmem>>, %arg7: memref<1x32xf32, #tpu.memory_space<vmem>>, %arg8: memref<32x128xbf16, #tpu.memory_space<vmem>>, %arg9: memref<1x128xf32, #tpu.memory_space<vmem>>, %arg10: memref<128x32xbf16, #tpu.memory_space<vmem>>, %arg11: memref<1x32xf32, #tpu.memory_space<vmem>>, %arg12: memref<1x32xf32, #tpu.memory_space<vmem>>, %arg13: memref<1x32xf32, #tpu.memory_space<vmem>>, %arg14: memref<16x32xf32, #tpu.memory_space<vmem>>) attributes {dimension_semantics = [], scalar_prefetch = 0 : i64, scratch_operands = 0 : i64, tpu.core_type = #tpu.core_type<tc>} {
    %c0 = arith.constant 0 : index
    %c0_0 = arith.constant 0 : index
    %0 = vector.load %arg0[%c0, %c0_0] : memref<16x32xf32, #tpu.memory_space<vmem>>, vector<16x32xf32>
    %1 = arith.truncf %0 : vector<16x32xf32> to vector<16x32xbf16>
    %c0_1 = arith.constant 0 : index
    %c0_2 = arith.constant 0 : index
    %2 = vector.load %arg2[%c0_1, %c0_2] : memref<32x96xbf16, #tpu.memory_space<vmem>>, vector<32x96xbf16>
    %cst = arith.constant dense<0.000000e+00> : vector<16x96xf32>
    %3 = tpu.matmul %1, %2, %cst {dimension_numbers = #tpu.dot_dimension_numbers<[1], [0], [0], [1], [0, 0, 1, 1], [], []>} : vector<16x32xbf16>, vector<32x96xbf16>, vector<16x96xf32> -> vector<16x96xf32>
    %c0_3 = arith.constant 0 : index
    %c0_4 = arith.constant 0 : index
    %4 = vector.load %arg3[%c0_3, %c0_4] : memref<1x96xf32, #tpu.memory_space<vmem>>, vector<1x96xf32>
    %5 = vector.broadcast %4 : vector<1x96xf32> to vector<16x96xf32>
    %6 = arith.addf %3, %5 : vector<16x96xf32>
    %7 = vector.extract_strided_slice %6 {offsets = [0, 0], sizes = [16, 32], strides = [1, 1]} : vector<16x96xf32> to vector<16x32xf32>
    %8 = vector.shape_cast %7 : vector<16x32xf32> to vector<2x8x32xf32>
    %9 = vector.extract_strided_slice %6 {offsets = [0, 32], sizes = [16, 32], strides = [1, 1]} : vector<16x96xf32> to vector<16x32xf32>
    %10 = vector.shape_cast %9 : vector<16x32xf32> to vector<2x8x32xf32>
    %11 = vector.extract_strided_slice %6 {offsets = [0, 64], sizes = [16, 32], strides = [1, 1]} : vector<16x96xf32> to vector<16x32xf32>
    %12 = vector.shape_cast %11 : vector<16x32xf32> to vector<2x8x32xf32>
    %c0_5 = arith.constant 0 : index
    %c0_6 = arith.constant 0 : index
    %c0_7 = arith.constant 0 : index
    %13 = vector.load %arg1[%c0_5, %c0_6, %c0_7] : memref<2x1x8xf32, #tpu.memory_space<vmem>>, vector<2x1x8xf32>
    %14 = vector.extract_strided_slice %8 {offsets = [0, 0, 0], sizes = [2, 8, 16], strides = [1, 1, 1]} : vector<2x8x32xf32> to vector<2x8x16xf32>
    %15 = arith.truncf %14 : vector<2x8x16xf32> to vector<2x8x16xbf16>
    %16 = vector.extract_strided_slice %10 {offsets = [0, 0, 0], sizes = [2, 8, 16], strides = [1, 1, 1]} : vector<2x8x32xf32> to vector<2x8x16xf32>
    %17 = arith.truncf %16 : vector<2x8x16xf32> to vector<2x8x16xbf16>
    %18 = vector.extract_strided_slice %12 {offsets = [0, 0, 0], sizes = [2, 8, 16], strides = [1, 1, 1]} : vector<2x8x32xf32> to vector<2x8x16xf32>
    %19 = arith.truncf %18 : vector<2x8x16xf32> to vector<2x8x16xbf16>
    "tpu.trace_start"() <{level = 10 : i32, message = "bqd,bkd->bqk"}> : () -> ()
    %cst_8 = arith.constant dense<0.000000e+00> : vector<2x8x8xf32>
    %20 = tpu.matmul %15, %17, %cst_8 {dimension_numbers = #tpu.dot_dimension_numbers<[2], [2], [1], [1], [0, 0, 0, 1, 1, 1], [0], [0]>} : vector<2x8x16xbf16>, vector<2x8x16xbf16>, vector<2x8x8xf32> -> vector<2x8x8xf32>
    "tpu.trace_stop"() : () -> ()
    %cst_9 = arith.constant 2.500000e-01 : f32
    %21 = vector.broadcast %cst_9 : f32 to vector<2x8x8xf32>
    %22 = arith.mulf %20, %21 : vector<2x8x8xf32>
    %23 = vector.broadcast %13 : vector<2x1x8xf32> to vector<2x8x8xf32>
    %24 = arith.addf %22, %23 : vector<2x8x8xf32>
    %cst_10 = arith.constant dense<0xFF800000> : vector<2x8xf32>
    %25 = vector.multi_reduction <maximumf>, %24, %cst_10 [2] : vector<2x8x8xf32> to vector<2x8xf32>
    %cst_11 = arith.constant 0xFF800000 : f32
    %26 = vector.broadcast %cst_11 : f32 to vector<2x8xf32>
    %27 = arith.maximumf %26, %25 : vector<2x8xf32>
    %28 = vector.shape_cast %27 : vector<2x8xf32> to vector<2x8x1xf32>
    %29 = vector.broadcast %28 : vector<2x8x1xf32> to vector<2x8x8xf32>
    %30 = arith.subf %24, %29 : vector<2x8x8xf32>
    %31 = math.exp %30 : vector<2x8x8xf32>
    %cst_12 = arith.constant dense<0.000000e+00> : vector<2x8xf32>
    %32 = vector.multi_reduction <add>, %31, %cst_12 [2] : vector<2x8x8xf32> to vector<2x8xf32>
    %33 = vector.shape_cast %32 : vector<2x8xf32> to vector<2x8x1xf32>
    %34 = vector.broadcast %33 : vector<2x8x1xf32> to vector<2x8x8xf32>
    %35 = arith.divf %31, %34 : vector<2x8x8xf32>
    %36 = arith.truncf %35 : vector<2x8x8xf32> to vector<2x8x8xbf16>
    "tpu.trace_start"() <{level = 10 : i32, message = "bqk,bkd->bqd"}> : () -> ()
    %cst_13 = arith.constant dense<0.000000e+00> : vector<2x8x16xf32>
    %37 = tpu.matmul %36, %19, %cst_13 {dimension_numbers = #tpu.dot_dimension_numbers<[2], [1], [1], [2], [0, 0, 0, 1, 1, 2], [0], [0]>} : vector<2x8x8xbf16>, vector<2x8x16xbf16>, vector<2x8x16xf32> -> vector<2x8x16xf32>
    "tpu.trace_stop"() : () -> ()
    %38 = vector.extract_strided_slice %8 {offsets = [0, 0, 16], sizes = [2, 8, 16], strides = [1, 1, 1]} : vector<2x8x32xf32> to vector<2x8x16xf32>
    %39 = arith.truncf %38 : vector<2x8x16xf32> to vector<2x8x16xbf16>
    %40 = vector.extract_strided_slice %10 {offsets = [0, 0, 16], sizes = [2, 8, 16], strides = [1, 1, 1]} : vector<2x8x32xf32> to vector<2x8x16xf32>
    %41 = arith.truncf %40 : vector<2x8x16xf32> to vector<2x8x16xbf16>
    %42 = vector.extract_strided_slice %12 {offsets = [0, 0, 16], sizes = [2, 8, 16], strides = [1, 1, 1]} : vector<2x8x32xf32> to vector<2x8x16xf32>
    %43 = arith.truncf %42 : vector<2x8x16xf32> to vector<2x8x16xbf16>
    "tpu.trace_start"() <{level = 10 : i32, message = "bqd,bkd->bqk"}> : () -> ()
    %cst_14 = arith.constant dense<0.000000e+00> : vector<2x8x8xf32>
    %44 = tpu.matmul %39, %41, %cst_14 {dimension_numbers = #tpu.dot_dimension_numbers<[2], [2], [1], [1], [0, 0, 0, 1, 1, 1], [0], [0]>} : vector<2x8x16xbf16>, vector<2x8x16xbf16>, vector<2x8x8xf32> -> vector<2x8x8xf32>
    "tpu.trace_stop"() : () -> ()
    %cst_15 = arith.constant 2.500000e-01 : f32
    %45 = vector.broadcast %cst_15 : f32 to vector<2x8x8xf32>
    %46 = arith.mulf %44, %45 : vector<2x8x8xf32>
    %47 = vector.broadcast %13 : vector<2x1x8xf32> to vector<2x8x8xf32>
    %48 = arith.addf %46, %47 : vector<2x8x8xf32>
    %cst_16 = arith.constant dense<0xFF800000> : vector<2x8xf32>
    %49 = vector.multi_reduction <maximumf>, %48, %cst_16 [2] : vector<2x8x8xf32> to vector<2x8xf32>
    %cst_17 = arith.constant 0xFF800000 : f32
    %50 = vector.broadcast %cst_17 : f32 to vector<2x8xf32>
    %51 = arith.maximumf %50, %49 : vector<2x8xf32>
    %52 = vector.shape_cast %51 : vector<2x8xf32> to vector<2x8x1xf32>
    %53 = vector.broadcast %52 : vector<2x8x1xf32> to vector<2x8x8xf32>
    %54 = arith.subf %48, %53 : vector<2x8x8xf32>
    %55 = math.exp %54 : vector<2x8x8xf32>
    %cst_18 = arith.constant dense<0.000000e+00> : vector<2x8xf32>
    %56 = vector.multi_reduction <add>, %55, %cst_18 [2] : vector<2x8x8xf32> to vector<2x8xf32>
    %57 = vector.shape_cast %56 : vector<2x8xf32> to vector<2x8x1xf32>
    %58 = vector.broadcast %57 : vector<2x8x1xf32> to vector<2x8x8xf32>
    %59 = arith.divf %55, %58 : vector<2x8x8xf32>
    %60 = arith.truncf %59 : vector<2x8x8xf32> to vector<2x8x8xbf16>
    "tpu.trace_start"() <{level = 10 : i32, message = "bqk,bkd->bqd"}> : () -> ()
    %cst_19 = arith.constant dense<0.000000e+00> : vector<2x8x16xf32>
    %61 = tpu.matmul %60, %43, %cst_19 {dimension_numbers = #tpu.dot_dimension_numbers<[2], [1], [1], [2], [0, 0, 0, 1, 1, 2], [0], [0]>} : vector<2x8x8xbf16>, vector<2x8x16xbf16>, vector<2x8x16xf32> -> vector<2x8x16xf32>
    "tpu.trace_stop"() : () -> ()
    %62 = tpu.concatenate %37, %61 in 2 : vector<2x8x16xf32>, vector<2x8x16xf32> -> vector<2x8x32xf32>
    %63 = vector.shape_cast %62 : vector<2x8x32xf32> to vector<16x32xf32>
    %64 = arith.truncf %63 : vector<16x32xf32> to vector<16x32xbf16>
    %c0_20 = arith.constant 0 : index
    %c0_21 = arith.constant 0 : index
    %65 = vector.load %arg4[%c0_20, %c0_21] : memref<32x32xbf16, #tpu.memory_space<vmem>>, vector<32x32xbf16>
    %cst_22 = arith.constant dense<0.000000e+00> : vector<16x32xf32>
    %66 = tpu.matmul %64, %65, %cst_22 {dimension_numbers = #tpu.dot_dimension_numbers<[1], [0], [0], [1], [0, 0, 1, 1], [], []>} : vector<16x32xbf16>, vector<32x32xbf16>, vector<16x32xf32> -> vector<16x32xf32>
    %c0_23 = arith.constant 0 : index
    %c0_24 = arith.constant 0 : index
    %67 = vector.load %arg5[%c0_23, %c0_24] : memref<1x32xf32, #tpu.memory_space<vmem>>, vector<1x32xf32>
    %68 = vector.broadcast %67 : vector<1x32xf32> to vector<16x32xf32>
    %69 = arith.addf %66, %68 : vector<16x32xf32>
    %70 = arith.addf %0, %69 : vector<16x32xf32>
    %c0_25 = arith.constant 0 : index
    %c0_26 = arith.constant 0 : index
    %71 = vector.load %arg6[%c0_25, %c0_26] : memref<1x32xf32, #tpu.memory_space<vmem>>, vector<1x32xf32>
    %c0_27 = arith.constant 0 : index
    %c0_28 = arith.constant 0 : index
    %72 = vector.load %arg7[%c0_27, %c0_28] : memref<1x32xf32, #tpu.memory_space<vmem>>, vector<1x32xf32>
    %cst_29 = arith.constant dense<0.000000e+00> : vector<16xf32>
    %73 = vector.multi_reduction <add>, %70, %cst_29 [1] : vector<16x32xf32> to vector<16xf32>
    %74 = vector.shape_cast %73 : vector<16xf32> to vector<16x1xf32>
    %cst_30 = arith.constant 3.200000e+01 : f32
    %75 = vector.broadcast %cst_30 : f32 to vector<16x1xf32>
    %76 = arith.divf %74, %75 : vector<16x1xf32>
    %77 = vector.broadcast %76 : vector<16x1xf32> to vector<16x32xf32>
    %78 = arith.subf %70, %77 : vector<16x32xf32>
    %79 = arith.mulf %78, %78 : vector<16x32xf32>
    %cst_31 = arith.constant dense<0.000000e+00> : vector<16xf32>
    %80 = vector.multi_reduction <add>, %79, %cst_31 [1] : vector<16x32xf32> to vector<16xf32>
    %81 = vector.shape_cast %80 : vector<16xf32> to vector<16x1xf32>
    %cst_32 = arith.constant 3.200000e+01 : f32
    %82 = vector.broadcast %cst_32 : f32 to vector<16x1xf32>
    %83 = arith.divf %81, %82 : vector<16x1xf32>
    %84 = vector.broadcast %76 : vector<16x1xf32> to vector<16x32xf32>
    %85 = arith.subf %70, %84 : vector<16x32xf32>
    %cst_33 = arith.constant 9.99999996E-13 : f32
    %86 = vector.broadcast %cst_33 : f32 to vector<16x1xf32>
    %87 = arith.addf %83, %86 : vector<16x1xf32>
    %88 = math.rsqrt %87 : vector<16x1xf32>
    %89 = vector.broadcast %88 : vector<16x1xf32> to vector<16x32xf32>
    %90 = arith.mulf %85, %89 : vector<16x32xf32>
    %91 = vector.broadcast %71 : vector<1x32xf32> to vector<16x32xf32>
    %92 = arith.mulf %90, %91 : vector<16x32xf32>
    %93 = vector.broadcast %72 : vector<1x32xf32> to vector<16x32xf32>
    %94 = arith.addf %92, %93 : vector<16x32xf32>
    %95 = arith.truncf %94 : vector<16x32xf32> to vector<16x32xbf16>
    %c0_34 = arith.constant 0 : index
    %c0_35 = arith.constant 0 : index
    %96 = vector.load %arg8[%c0_34, %c0_35] : memref<32x128xbf16, #tpu.memory_space<vmem>>, vector<32x128xbf16>
    %cst_36 = arith.constant dense<0.000000e+00> : vector<16x128xf32>
    %97 = tpu.matmul %95, %96, %cst_36 {dimension_numbers = #tpu.dot_dimension_numbers<[1], [0], [0], [1], [0, 0, 1, 1], [], []>} : vector<16x32xbf16>, vector<32x128xbf16>, vector<16x128xf32> -> vector<16x128xf32>
    %c0_37 = arith.constant 0 : index
    %c0_38 = arith.constant 0 : index
    %98 = vector.load %arg9[%c0_37, %c0_38] : memref<1x128xf32, #tpu.memory_space<vmem>>, vector<1x128xf32>
    %99 = vector.broadcast %98 : vector<1x128xf32> to vector<16x128xf32>
    %100 = arith.addf %97, %99 : vector<16x128xf32>
    %101 = arith.mulf %100, %100 : vector<16x128xf32>
    %102 = arith.mulf %100, %101 : vector<16x128xf32>
    %cst_39 = arith.constant 4.471500e-02 : f32
    %103 = vector.broadcast %cst_39 : f32 to vector<16x128xf32>
    %104 = arith.mulf %103, %102 : vector<16x128xf32>
    %105 = arith.addf %100, %104 : vector<16x128xf32>
    %cst_40 = arith.constant 0.797884583 : f32
    %106 = vector.broadcast %cst_40 : f32 to vector<16x128xf32>
    %107 = arith.mulf %106, %105 : vector<16x128xf32>
    %108 = math.tanh %107 : vector<16x128xf32>
    %cst_41 = arith.constant 1.000000e+00 : f32
    %109 = vector.broadcast %cst_41 : f32 to vector<16x128xf32>
    %110 = arith.addf %109, %108 : vector<16x128xf32>
    %cst_42 = arith.constant 5.000000e-01 : f32
    %111 = vector.broadcast %cst_42 : f32 to vector<16x128xf32>
    %112 = arith.mulf %111, %110 : vector<16x128xf32>
    %113 = arith.mulf %100, %112 : vector<16x128xf32>
    %114 = arith.truncf %113 : vector<16x128xf32> to vector<16x128xbf16>
    %c0_43 = arith.constant 0 : index
    %c0_44 = arith.constant 0 : index
    %115 = vector.load %arg10[%c0_43, %c0_44] : memref<128x32xbf16, #tpu.memory_space<vmem>>, vector<128x32xbf16>
    %cst_45 = arith.constant dense<0.000000e+00> : vector<16x32xf32>
    %116 = tpu.matmul %114, %115, %cst_45 {dimension_numbers = #tpu.dot_dimension_numbers<[1], [0], [0], [1], [0, 0, 1, 1], [], []>} : vector<16x128xbf16>, vector<128x32xbf16>, vector<16x32xf32> -> vector<16x32xf32>
    %c0_46 = arith.constant 0 : index
    %c0_47 = arith.constant 0 : index
    %117 = vector.load %arg11[%c0_46, %c0_47] : memref<1x32xf32, #tpu.memory_space<vmem>>, vector<1x32xf32>
    %118 = vector.broadcast %117 : vector<1x32xf32> to vector<16x32xf32>
    %119 = arith.addf %116, %118 : vector<16x32xf32>
    %120 = arith.addf %94, %119 : vector<16x32xf32>
    %c0_48 = arith.constant 0 : index
    %c0_49 = arith.constant 0 : index
    %121 = vector.load %arg12[%c0_48, %c0_49] : memref<1x32xf32, #tpu.memory_space<vmem>>, vector<1x32xf32>
    %c0_50 = arith.constant 0 : index
    %c0_51 = arith.constant 0 : index
    %122 = vector.load %arg13[%c0_50, %c0_51] : memref<1x32xf32, #tpu.memory_space<vmem>>, vector<1x32xf32>
    %cst_52 = arith.constant dense<0.000000e+00> : vector<16xf32>
    %123 = vector.multi_reduction <add>, %120, %cst_52 [1] : vector<16x32xf32> to vector<16xf32>
    %124 = vector.shape_cast %123 : vector<16xf32> to vector<16x1xf32>
    %cst_53 = arith.constant 3.200000e+01 : f32
    %125 = vector.broadcast %cst_53 : f32 to vector<16x1xf32>
    %126 = arith.divf %124, %125 : vector<16x1xf32>
    %127 = vector.broadcast %126 : vector<16x1xf32> to vector<16x32xf32>
    %128 = arith.subf %120, %127 : vector<16x32xf32>
    %129 = arith.mulf %128, %128 : vector<16x32xf32>
    %cst_54 = arith.constant dense<0.000000e+00> : vector<16xf32>
    %130 = vector.multi_reduction <add>, %129, %cst_54 [1] : vector<16x32xf32> to vector<16xf32>
    %131 = vector.shape_cast %130 : vector<16xf32> to vector<16x1xf32>
    %cst_55 = arith.constant 3.200000e+01 : f32
    %132 = vector.broadcast %cst_55 : f32 to vector<16x1xf32>
    %133 = arith.divf %131, %132 : vector<16x1xf32>
    %134 = vector.broadcast %126 : vector<16x1xf32> to vector<16x32xf32>
    %135 = arith.subf %120, %134 : vector<16x32xf32>
    %cst_56 = arith.constant 9.99999996E-13 : f32
    %136 = vector.broadcast %cst_56 : f32 to vector<16x1xf32>
    %137 = arith.addf %133, %136 : vector<16x1xf32>
    %138 = math.rsqrt %137 : vector<16x1xf32>
    %139 = vector.broadcast %138 : vector<16x1xf32> to vector<16x32xf32>
    %140 = arith.mulf %135, %139 : vector<16x32xf32>
    %141 = vector.broadcast %121 : vector<1x32xf32> to vector<16x32xf32>
    %142 = arith.mulf %140, %141 : vector<16x32xf32>
    %143 = vector.broadcast %122 : vector<1x32xf32> to vector<16x32xf32>
    %144 = arith.addf %142, %143 : vector<16x32xf32>
    %c0_57 = arith.constant 0 : index
    %c0_58 = arith.constant 0 : index
    %145 = vector.load %arg14[%c0_57, %c0_58] : memref<16x32xf32, #tpu.memory_space<vmem>>, vector<16x32xf32>
    tpu.vector_store %arg14[%c0_57, %c0_58], %144 {strides = array<i32>} : memref<16x32xf32, #tpu.memory_space<vmem>>, vector<16x32xf32>,
    return
  }
}

</mosaic_0001>

<llo_original>
// kernel: bert_forward.4
$region0: #{bert_forward.4}
  #allocation0 [shape = 'u32[]', space=smem, size = 0x4, offset = 0x4, fixed_abs, tag = 'smem constant byte address 0x4 - core index']
  #allocation1 [shape = 'u32[144,128]{1,0:T(1,128)}', space=vmem, size = 0x12000, scoped, tag = 'internal scratch']
  %s0 = inlined_call_operand.vmem [shape: f32[16,32], index: 0, kind: input, shape index: {}]
  %s1 = inlined_call_operand.vmem [shape: f32[1,32], index: 1, kind: input, shape index: {}]
  %s2 = inlined_call_operand.vmem [shape: f32[1,32], index: 2, kind: input, shape index: {}]
  %s3 = inlined_call_operand.vmem [shape: f32[16,32], index: 3, kind: output, shape index: {}]
  %s4 = sld [smem:[#allocation0]]
  $region22: #{bert_forward.4} parent=0
    _
  %s6 = ssub.s32 1, %s4
  %s7 = scalar_select 0, %s6, %s4
  // Predicated region
  $region2: #{bert_forward.4} parent=0 // pred_check
    _
  $region3: #{bert_forward.4} parent=0 // pred_check_branch
    %9 = sbr.rel (0) target = $region5
  $region4: #{bert_forward.4} parent=0 // pred_region
    _
  $region5: #{bert_forward.4} parent=0 // pred_fallthru
    _
  // Predicated region
  $region6: #{bert_forward.4} parent=0 // pred_check
    _
  $region7: #{bert_forward.4} parent=0 // pred_check_branch
    %11 = sbr.rel (0) target = $region9
  $region8: #{bert_forward.4} parent=0 // pred_region
    _
  $region9: #{bert_forward.4} parent=0 // pred_fallthru
    _
  // Predicated region
  $region10: #{bert_forward.4} parent=0 // pred_check
    _
  $region11: #{bert_forward.4} parent=0 // pred_check_branch
    %13 = sbr.rel (0) target = $region13
  $region12: #{bert_forward.4} parent=0 // pred_region
    _
  $region13: #{bert_forward.4} parent=0 // pred_fallthru
    _
  %v14 = vld [vmem:[%s0] sm:$0xff]
  %v15 = vld [vmem:[%s0 + $0x8] sm:$0xff]
  %v16 = vld [vmem:[%s1] sm:$0x1]
  %v17 = vld [vmem:[%s2] sm:$0x1]
  %vm18 = vcmask 261120
  %v19 = vsel %vm18, %v14, 0.0
  %20 = vadd.xlane.f32.xlu0 %v19
  %v21 = vpop.xlane.xlu0 %20
  %v22 = vsel %vm18, %v15, 0.0
  %23 = vadd.xlane.f32.xlu0 %v22
  %v24 = vpop.xlane.xlu0 %23
  %v25 = vrcp.pop 32.0
  %v26 = vmul.f32 %v21, %v25
  %v27 = vmul.f32 %v24, %v25
  %v28 = vsub.f32 %v14, %v26
  %v29 = vsub.f32 %v15, %v27
  %v30 = vmul.f32 %v28, %v28
  %v31 = vmul.f32 %v29, %v29
  %v32 = vsel %vm18, %v30, 0.0
  %33 = vadd.xlane.f32.xlu0 %v32
  %v34 = vpop.xlane.xlu0 %33
  %v35 = vsel %vm18, %v31, 0.0
  %36 = vadd.xlane.f32.xlu0 %v35
  %v37 = vpop.xlane.xlu0 %36
  %v38 = vmul.f32 %v34, %v25
  %v39 = vmul.f32 %v37, %v25
  %v40 = vadd.f32 %v38, 1e-12
  %v41 = vadd.f32 %v39, 1e-12
  %v42 = vrsqrt.pop %v40
  %v43 = vrsqrt.pop %v41
  %v44 = vmul.f32 %v28, %v42
  %v45 = vmul.f32 %v29, %v43
  %v47 = vlaneseq
  %v48 = vshrl.u32 %v47, 7
  %v49 = vsub.s32 0, %v48
  %v50 = vrot.slane %v16, %v49
  %v52 = vmul.f32 %v44, %v50
  %v53 = vmul.f32 %v45, %v50
  %v55 = vlaneseq
  %v56 = vshrl.u32 %v55, 7
  %v57 = vsub.s32 0, %v56
  %v58 = vrot.slane %v17, %v57
  %v60 = vadd.f32 %v52, %v58
  %v61 = vadd.f32 %v53, %v58
  %62 = vst.msk [vmem:[%s3] sm:$0xff] %vm18, %v60
  %63 = vst.msk [vmem:[%s3 + $0x8] sm:$0xff] %vm18, %v61
  // Predicated region
  $region14: #{bert_forward.4} parent=0 // pred_check
    _
  $region15: #{bert_forward.4} parent=0 // pred_check_branch
    %65 = sbr.rel (0) target = $region17
  $region16: #{bert_forward.4} parent=0 // pred_region
    _
  $region17: #{bert_forward.4} parent=0 // pred_fallthru
    _
  // Predicated region
  $region18: #{bert_forward.4} parent=0 // pred_check
    _
  $region19: #{bert_forward.4} parent=0 // pred_check_branch
    %67 = sbr.rel (0) target = $region21
  $region20: #{bert_forward.4} parent=0 // pred_region
    _
  $region21: #{bert_forward.4} parent=0 // pred_fallthru
    _

// kernel: bert_forward.7
$region0: #{bert_forward.7}
  #allocation0 [shape = 'u32[]', space=smem, size = 0x4, offset = 0x4, fixed_abs, tag = 'smem constant byte address 0x4 - core index']
  #allocation1 [shape = 'u32[144,128]{1,0:T(1,128)}', space=vmem, size = 0x12000, scoped, tag = 'internal scratch']
  %s0 = inlined_call_operand.vmem [shape: f32[2,32], index: 0, kind: input, shape index: {}]
  %s1 = inlined_call_operand.vmem [shape: bf16[32,32], index: 1, kind: input, shape index: {}]
  %s2 = inlined_call_operand.vmem [shape: f32[1,32], index: 2, kind: input, shape index: {}]
  %s3 = inlined_call_operand.vmem [shape: bf16[32,2], index: 3, kind: input, shape index: {}]
  %s4 = inlined_call_operand.vmem [shape: f32[1,2], index: 4, kind: input, shape index: {}]
  %s5 = inlined_call_operand.hbm [shape: f32[2,2], index: 5, kind: output, shape index: {}]
  %s6 = sld [smem:[#allocation0]]
  $region30: #{bert_forward.7} parent=0
    _
  %s8 = ssub.s32 1, %s6
  %s9 = scalar_select 0, %s8, %s6
  $region1: #{bert_forward.7} parent=0
    #allocation2 [shape = 'u8[1024]{0}', space=vmem, size = 0x400, scoped, tag = 'output window, operand 0, single buffered']
    #allocation3 [shape = 's32[1]{0}', space=sflag, size = 0x4, scoped, tag = 'scoped memory for bert_forward.7']
    %10 = vsyncpa [#allocation3], 0
    // Predicated region
    $region2: #{bert_forward.7} parent=1 // pred_check
      _
    $region3: #{bert_forward.7} parent=1 // pred_check_branch
      %12 = sbr.rel (0) target = $region5
    $region4: #{bert_forward.7} parent=1 // pred_region
      _
    $region5: #{bert_forward.7} parent=1 // pred_fallthru
      _
    // Predicated region
    $region6: #{bert_forward.7} parent=1 // pred_check
      _
    $region7: #{bert_forward.7} parent=1 // pred_check_branch
      %14 = sbr.rel (0) target = $region9
    $region8: #{bert_forward.7} parent=1 // pred_region
      _
    $region9: #{bert_forward.7} parent=1 // pred_fallthru
      _
    // Predicated region
    $region10: #{bert_forward.7} parent=1 // pred_check
      _
    $region11: #{bert_forward.7} parent=1 // pred_check_branch
      %16 = sbr.rel (0) target = $region13
    $region12: #{bert_forward.7} parent=1 // pred_region
      _
    $region13: #{bert_forward.7} parent=1 // pred_fallthru
      _
    // Predicated region
    $region14: #{bert_forward.7} parent=1 // pred_check
      _
    $region15: #{bert_forward.7} parent=1 // pred_check_branch
      %18 = sbr.rel (0) target = $region17
    $region16: #{bert_forward.7} parent=1 // pred_region
      _
    $region17: #{bert_forward.7} parent=1 // pred_fallthru
      _
    // Predicated region
    $region18: #{bert_forward.7} parent=1 // pred_check
      _
    $region19: #{bert_forward.7} parent=1 // pred_check_branch
      %20 = sbr.rel (0) target = $region21
    $region20: #{bert_forward.7} parent=1 // pred_region
      _
    $region21: #{bert_forward.7} parent=1 // pred_fallthru
      _
    %v22 = vld [vmem:[%s0] sm:$0x3]
    %v23 = vpack.c.bf16 %v22, %v22
    %v24 = vld [vmem:[%s1] sm:$0xf]
    %v25 = vld [vmem:[%s1 + $0x4] sm:$0xf]
    %v26 = vld [vmem:[%s1 + $0x8] sm:$0xf]
    %v27 = vld [vmem:[%s1 + $0xc] sm:$0xf]
    %v28 = vld [vmem:[%s2] sm:$0x1]
    %v30 = vlaneseq
    %v31 = vshrl.u32 %v30, 7
    %v32 = vsub.s32 0, %v31
    %v33 = vrot.slane %v28, %v32
    %v39 = vunpack.c.l.b16 %v24
    %v40 = vunpack.c.l.b16 %v25
    %v41 = vunpack.c.l.b16 %v26
    %v42 = vunpack.c.l.b16 %v27
    %v43 = vpack.c.b16 %v40, %v39
    %v44 = vpack.c.b16 %v42, %v41
    %vm47 = vcmask 261120
    %v49 = vsel %vm47, %v23, 0
    %51 = vmatprep.subr.bf16.mxu0 0
    %52 = vmatpush1.bf16.msra.mxu0 0
    %53 = vmatprep.subr.bf16.mxu0 0
    %54 = vmatpush1.bf16.msra.mxu0 0
    %55 = vmatprep.subr.bf16.mxu0 0
    %56 = vmatpush1.bf16.msra.mxu0 0
    %57 = vmatprep.subr.bf16.mxu0 0
    %58 = vmatpush1.bf16.msra.mxu0 0
    %59 = vmatprep.subr.bf16.mxu0 0
    %60 = vmatpush1.bf16.msra.mxu0 0
    %61 = vmatprep.subr.bf16.mxu0 0
    %62 = vmatpush1.bf16.msra.mxu0 0
    %63 = vmatprep.subr.bf16.mxu0 0
    %64 = vmatpush1.bf16.msra.mxu0 %v44
    %65 = vmatprep.subr.bf16.mxu0 0
    %66 = vmatpush1.bf16.msra.mxu0 %v43
    %67 = vmatprep.subr.bf16.mxu0 0
    %68 = vmatpush2.bf16.msra.mxu0 0
    %69 = vmatprep.subr.bf16.mxu0 0
    %70 = vmatpush2.bf16.msra.mxu0 0
    %71 = vmatprep.subr.bf16.mxu0 0
    %72 = vmatpush2.bf16.msra.mxu0 0
    %73 = vmatprep.subr.bf16.mxu0 0
    %74 = vmatpush2.bf16.msra.mxu0 0
    %75 = vmatprep.subr.bf16.mxu0 0
    %76 = vmatpush2.bf16.msra.mxu0 0
    %77 = vmatprep.subr.bf16.mxu0 0
    %78 = vmatpush2.bf16.msra.mxu0 0
    %79 = vmatprep.subr.bf16.mxu0 0
    %80 = vmatpush2.bf16.msra.mxu0 0
    %81 = vmatprep.subr.bf16.mxu0 0
    %82 = vmatpush2.bf16.msra.mxu0 0
    %83 = vmatprep.mubr.bf16.mxu0 0
    %84 = vmatmul.mubr.bf16.gmra.mxu0 %v49
    %v85 = vpop.f32.mrf.mxu0
    %v86 = vadd.f32 %v33, %v85
    %v87 = vpop.f32.mrf.mxu0
    %v88 = vpop.f32.mrf.mxu0
    %v89 = vpop.f32.mrf.mxu0
    %90 = vdwg.mxu0
    %v91 = vtanh.pop %v86
    %v92 = vpack.c.bf16 %v91, %v91
    %v93 = vld [vmem:[%s3] sm:$0xf]
    %v94 = vld [vmem:[%s3 + $0x4] sm:$0xf]
    %v95 = vld [vmem:[%s3 + $0x8] sm:$0xf]
    %v96 = vld [vmem:[%s3 + $0xc] sm:$0xf]
    %v97 = vld [vmem:[%s4] sm:$0x1]
    %v99 = vlaneseq
    %v100 = vshrl.u32 %v99, 7
    %v101 = vsub.s32 0, %v100
    %v102 = vrot.slane %v97, %v101
    %v108 = vunpack.c.l.b16 %v93
    %v109 = vunpack.c.l.b16 %v94
    %v110 = vunpack.c.l.b16 %v95
    %v111 = vunpack.c.l.b16 %v96
    %v112 = vpack.c.b16 %v109, %v108
    %v113 = vpack.c.b16 %v111, %v110
    %v117 = vsel %vm47, %v92, 0
    %119 = vmatprep.subr.bf16.mxu0 0
    %120 = vmatpush1.bf16.msra.mxu0 0
    %121 = vmatprep.subr.bf16.mxu0 0
    %122 = vmatpush1.bf16.msra.mxu0 0
    %123 = vmatprep.subr.bf16.mxu0 0
    %124 = vmatpush1.bf16.msra.mxu0 0
    %125 = vmatprep.subr.bf16.mxu0 0
    %126 = vmatpush1.bf16.msra.mxu0 0
    %127 = vmatprep.subr.bf16.mxu0 0
    %128 = vmatpush1.bf16.msra.mxu0 0
    %129 = vmatprep.subr.bf16.mxu0 0
    %130 = vmatpush1.bf16.msra.mxu0 0
    %131 = vmatprep.subr.bf16.mxu0 0
    %132 = vmatpush1.bf16.msra.mxu0 %v113
    %133 = vmatprep.subr.bf16.mxu0 0
    %134 = vmatpush1.bf16.msra.mxu0 %v112
    %135 = vmatprep.subr.bf16.mxu0 0
    %136 = vmatpush2.bf16.msra.mxu0 0
    %137 = vmatprep.subr.bf16.mxu0 0
    %138 = vmatpush2.bf16.msra.mxu0 0
    %139 = vmatprep.subr.bf16.mxu0 0
    %140 = vmatpush2.bf16.msra.mxu0 0
    %141 = vmatprep.subr.bf16.mxu0 0
    %142 = vmatpush2.bf16.msra.mxu0 0
    %143 = vmatprep.subr.bf16.mxu0 0
    %144 = vmatpush2.bf16.msra.mxu0 0
    %145 = vmatprep.subr.bf16.mxu0 0
    %146 = vmatpush2.bf16.msra.mxu0 0
    %147 = vmatprep.subr.bf16.mxu0 0
    %148 = vmatpush2.bf16.msra.mxu0 0
    %149 = vmatprep.subr.bf16.mxu0 0
    %150 = vmatpush2.bf16.msra.mxu0 0
    %151 = vmatprep.mubr.bf16.mxu0 0
    %152 = vmatmul.mubr.bf16.gmra.mxu0 %v117
    %v153 = vpop.f32.mrf.mxu0
    %v154 = vadd.f32 %v102, %v153
    %v155 = vpop.f32.mrf.mxu0
    %v156 = vpop.f32.mrf.mxu0
    %v157 = vpop.f32.mrf.mxu0
    %158 = vdwg.mxu0
    %vm159 = vcmask 9216
    %160 = vst.msk [vmem:[#allocation2] sm:$0x3] %vm159, %v154
    // Predicated region
    $region22: #{bert_forward.7} parent=1 // pred_check
      _
    $region23: #{bert_forward.7} parent=1 // pred_check_branch
      %162 = sbr.rel (0) target = $region25
    $region24: #{bert_forward.7} parent=1 // pred_region
      %s164 = ssub.s32 32, 32
      %165 = vsyncadd [#allocation3], %s164
      %s167 = sshll.u32 [#allocation2], 4
      %s168 = int_to_ptr.vmem [resolvable:$true] %s167
      %170 = dma.vmem_to_hbm [thread:$0]  %s168, 32, %s5, [#allocation3]
    $region25: #{bert_forward.7} parent=1 // pred_fallthru
      _
    // Predicated region
    $region26: #{bert_forward.7} parent=1 // pred_check
      _
    $region27: #{bert_forward.7} parent=1 // pred_check_branch
      %172 = sbr.rel (0) target = $region29
    $region28: #{bert_forward.7} parent=1 // pred_region
      %173 = dma.done [#allocation3], 32
    $region29: #{bert_forward.7} parent=1 // pred_fallthru
      _
    %174 = vsyncpa [#allocation3], 1

// kernel: bert_forward.5
$region0: #{bert_forward.5}
  #allocation0 [shape = 'u32[]', space=smem, size = 0x4, offset = 0x4, fixed_abs, tag = 'smem constant byte address 0x4 - core index']
  #allocation1 [shape = 'u32[144,128]{1,0:T(1,128)}', space=vmem, size = 0x12000, scoped, tag = 'internal scratch']
  %s0 = inlined_call_operand.vmem [shape: f32[16,32], index: 0, kind: input, shape index: {}]
  %s1 = inlined_call_operand.vmem [shape: f32[2,1,8], index: 1, kind: input, shape index: {}]
  %s2 = inlined_call_operand.vmem [shape: bf16[32,96], index: 2, kind: input, shape index: {}]
  %s3 = inlined_call_operand.vmem [shape: f32[1,96], index: 3, kind: input, shape index: {}]
  %s4 = inlined_call_operand.vmem [shape: bf16[32,32], index: 4, kind: input, shape index: {}]
  %s5 = inlined_call_operand.vmem [shape: f32[1,32], index: 5, kind: input, shape index: {}, may-alias: {5,7,11,13}]
  %s6 = inlined_call_operand.vmem [shape: f32[1,32], index: 6, kind: input, shape index: {}, may-alias: {6,12}]
  %s7 = inlined_call_operand.vmem [shape: f32[1,32], index: 7, kind: input, shape index: {}, may-alias: {5,7,11,13}]
  %s8 = inlined_call_operand.vmem [shape: bf16[32,128], index: 8, kind: input, shape index: {}]
  %s9 = inlined_call_operand.vmem [shape: f32[1,128], index: 9, kind: input, shape index: {}]
  %s10 = inlined_call_operand.vmem [shape: bf16[128,32], index: 10, kind: input, shape index: {}]
  %s11 = inlined_call_operand.vmem [shape: f32[1,32], index: 11, kind: input, shape index: {}, may-alias: {5,7,11,13}]
  %s12 = inlined_call_operand.vmem [shape: f32[1,32], index: 12, kind: input, shape index: {}, may-alias: {6,12}]
  %s13 = inlined_call_operand.vmem [shape: f32[1,32], index: 13, kind: input, shape index: {}, may-alias: {5,7,11,13}]
  %s14 = inlined_call_operand.vmem [shape: f32[16,32], index: 14, kind: output, shape index: {}]
  %s15 = sld [smem:[#allocation0]]
  $region66: #{bert_forward.5} parent=0
    _
  %s17 = ssub.s32 1, %s15
  %s18 = scalar_select 0, %s17, %s15
  // Predicated region
  $region2: #{bert_forward.5} parent=0 // pred_check
    _
  $region3: #{bert_forward.5} parent=0 // pred_check_branch
    %20 = sbr.rel (0) target = $region5
  $region4: #{bert_forward.5} parent=0 // pred_region
    _
  $region5: #{bert_forward.5} parent=0 // pred_fallthru
    _
  // Predicated region
  $region6: #{bert_forward.5} parent=0 // pred_check
    _
  $region7: #{bert_forward.5} parent=0 // pred_check_branch
    %22 = sbr.rel (0) target = $region9
  $region8: #{bert_forward.5} parent=0 // pred_region
    _
  $region9: #{bert_forward.5} parent=0 // pred_fallthru
    _
  // Predicated region
  $region10: #{bert_forward.5} parent=0 // pred_check
    _
  $region11: #{bert_forward.5} parent=0 // pred_check_branch
    %24 = sbr.rel (0) target = $region13
  $region12: #{bert_forward.5} parent=0 // pred_region
    _
  $region13: #{bert_forward.5} parent=0 // pred_fallthru
    _
  // Predicated region
  $region14: #{bert_forward.5} parent=0 // pred_check
    _
  $region15: #{bert_forward.5} parent=0 // pred_check_branch
    %26 = sbr.rel (0) target = $region17
  $region16: #{bert_forward.5} parent=0 // pred_region
    _
  $region17: #{bert_forward.5} parent=0 // pred_fallthru
    _
  // Predicated region
  $region18: #{bert_forward.5} parent=0 // pred_check
    _
  $region19: #{bert_forward.5} parent=0 // pred_check_branch
    %28 = sbr.rel (0) target = $region21
  $region20: #{bert_forward.5} parent=0 // pred_region
    _
  $region21: #{bert_forward.5} parent=0 // pred_fallthru
    _
  // Predicated region
  $region22: #{bert_forward.5} parent=0 // pred_check
    _
  $region23: #{bert_forward.5} parent=0 // pred_check_branch
    %30 = sbr.rel (0) target = $region25
  $region24: #{bert_forward.5} parent=0 // pred_region
    _
  $region25: #{bert_forward.5} parent=0 // pred_fallthru
    _
  // Predicated region
  $region26: #{bert_forward.5} parent=0 // pred_check
    _
  $region27: #{bert_forward.5} parent=0 // pred_check_branch
    %32 = sbr.rel (0) target = $region29
  $region28: #{bert_forward.5} parent=0 // pred_region
    _
  $region29: #{bert_forward.5} parent=0 // pred_fallthru
    _
  // Predicated region
  $region30: #{bert_forward.5} parent=0 // pred_check
    _
  $region31: #{bert_forward.5} parent=0 // pred_check_branch
    %34 = sbr.rel (0) target = $region33
  $region32: #{bert_forward.5} parent=0 // pred_region
    _
  $region33: #{bert_forward.5} parent=0 // pred_fallthru
    _
  // Predicated region
  $region34: #{bert_forward.5} parent=0 // pred_check
    _
  $region35: #{bert_forward.5} parent=0 // pred_check_branch
    %36 = sbr.rel (0) target = $region37
  $region36: #{bert_forward.5} parent=0 // pred_region
    _
  $region37: #{bert_forward.5} parent=0 // pred_fallthru
    _
  // Predicated region
  $region38: #{bert_forward.5} parent=0 // pred_check
    _
  $region39: #{bert_forward.5} parent=0 // pred_check_branch
    %38 = sbr.rel (0) target = $region41
  $region40: #{bert_forward.5} parent=0 // pred_region
    _
  $region41: #{bert_forward.5} parent=0 // pred_fallthru
    _
  // Predicated region
  $region42: #{bert_forward.5} parent=0 // pred_check
    _
  $region43: #{bert_forward.5} parent=0 // pred_check_branch
    %40 = sbr.rel (0) target = $region45
  $region44: #{bert_forward.5} parent=0 // pred_region
    _
  $region45: #{bert_forward.5} parent=0 // pred_fallthru
    _
  // Predicated region
  $region46: #{bert_forward.5} parent=0 // pred_check
    _
  $region47: #{bert_forward.5} parent=0 // pred_check_branch
    %42 = sbr.rel (0) target = $region49
  $region48: #{bert_forward.5} parent=0 // pred_region
    _
  $region49: #{bert_forward.5} parent=0 // pred_fallthru
    _
  // Predicated region
  $region50: #{bert_forward.5} parent=0 // pred_check
    _
  $region51: #{bert_forward.5} parent=0 // pred_check_branch
    %44 = sbr.rel (0) target = $region53
  $region52: #{bert_forward.5} parent=0 // pred_region
    _
  $region53: #{bert_forward.5} parent=0 // pred_fallthru
    _
  // Predicated region
  $region54: #{bert_forward.5} parent=0 // pred_check
    _
  $region55: #{bert_forward.5} parent=0 // pred_check_branch
    %46 = sbr.rel (0) target = $region57
  $region56: #{bert_forward.5} parent=0 // pred_region
    _
  $region57: #{bert_forward.5} parent=0 // pred_fallthru
    _
  %v48 = vld [vmem:[%s0] sm:$0xff]
  %v49 = vld [vmem:[%s0 + $0x8] sm:$0xff]
  %v50 = vpack.c.bf16 %v49, %v48
  %v51 = vld [vmem:[%s2] sm:$0xf]
  %v52 = vld [vmem:[%s2 + $0x4] sm:$0xf]
  %v53 = vld [vmem:[%s2 + $0x8] sm:$0xf]
  %v54 = vld [vmem:[%s2 + $0xc] sm:$0xf]
  %v55 = vld [vmem:[%s3] sm:$0x1]
  %v57 = vlaneseq
  %v58 = vshrl.u32 %v57, 7
  %v59 = vsub.s32 0, %v58
  %v60 = vrot.slane %v55, %v59
  %v66 = vunpack.c.l.b16 %v51
  %v67 = vunpack.c.l.b16 %v52
  %v68 = vunpack.c.l.b16 %v53
  %v69 = vunpack.c.l.b16 %v54
  %v70 = vpack.c.b16 %v67, %v66
  %v71 = vpack.c.b16 %v69, %v68
  %vm74 = vcmask 261120
  %v76 = vsel %vm74, %v50, 0
  %78 = vmatprep.subr.bf16.mxu0 0
  %79 = vmatpush1.bf16.msra.mxu0 0
  %80 = vmatprep.subr.bf16.mxu0 0
  %81 = vmatpush1.bf16.msra.mxu0 0
  %82 = vmatprep.subr.bf16.mxu0 0
  %83 = vmatpush1.bf16.msra.mxu0 0
  %84 = vmatprep.subr.bf16.mxu0 0
  %85 = vmatpush1.bf16.msra.mxu0 0
  %86 = vmatprep.subr.bf16.mxu0 0
  %87 = vmatpush1.bf16.msra.mxu0 0
  %88 = vmatprep.subr.bf16.mxu0 0
  %89 = vmatpush1.bf16.msra.mxu0 0
  %90 = vmatprep.subr.bf16.mxu0 0
  %91 = vmatpush1.bf16.msra.mxu0 %v71
  %92 = vmatprep.subr.bf16.mxu0 0
  %93 = vmatpush1.bf16.msra.mxu0 %v70
  %94 = vmatprep.subr.bf16.mxu0 0
  %95 = vmatpush2.bf16.msra.mxu0 0
  %96 = vmatprep.subr.bf16.mxu0 0
  %97 = vmatpush2.bf16.msra.mxu0 0
  %98 = vmatprep.subr.bf16.mxu0 0
  %99 = vmatpush2.bf16.msra.mxu0 0
  %100 = vmatprep.subr.bf16.mxu0 0
  %101 = vmatpush2.bf16.msra.mxu0 0
  %102 = vmatprep.subr.bf16.mxu0 0
  %103 = vmatpush2.bf16.msra.mxu0 0
  %104 = vmatprep.subr.bf16.mxu0 0
  %105 = vmatpush2.bf16.msra.mxu0 0
  %106 = vmatprep.subr.bf16.mxu0 0
  %107 = vmatpush2.bf16.msra.mxu0 0
  %108 = vmatprep.subr.bf16.mxu0 0
  %109 = vmatpush2.bf16.msra.mxu0 0
  %110 = vmatprep.mubr.bf16.mxu0 0
  %111 = vmatmul.mubr.bf16.gmra.mxu0 %v76
  %v112 = vpop.f32.mrf.mxu0
  %v113 = vadd.f32 %v60, %v112
  %v114 = vpop.f32.mrf.mxu0
  %v115 = vpop.f32.mrf.mxu0
  %v116 = vadd.f32 %v60, %v115
  %v117 = vpop.f32.mrf.mxu0
  %118 = vdwg.mxu0
  %v119 = vld [vmem:[%s1] sm:$0x1]
  %v120 = vld [vmem:[%s1 + $0x1] sm:$0x1]
  %v121 = vpack.c.bf16 %v113, %v113
  %v122 = vpack.c.bf16 %v116, %v116
  %124 = vrot.lane.b32.xlu0 %v121, 96
  %v125 = vpop.permute.xlu0 %124
  %vm126 = vcmask 130048
  %v128 = vsel %vm126, %v121, 0
  %v131 = vsel %vm126, %v125, 0
  %133 = vmatprep.subr.bf16.mxu0 0
  %134 = vmatpush1.bf16.xpose.msra.mxu0 0
  %135 = vmatprep.subr.bf16.mxu0 0
  %136 = vmatpush1.bf16.xpose.msra.mxu0 0
  %137 = vmatprep.subr.bf16.mxu0 0
  %138 = vmatpush1.bf16.xpose.msra.mxu0 0
  %139 = vmatprep.subr.bf16.mxu0 0
  %140 = vmatpush1.bf16.xpose.msra.mxu0 0
  %141 = vmatprep.subr.bf16.mxu0 0
  %142 = vmatpush1.bf16.xpose.msra.mxu0 0
  %143 = vmatprep.subr.bf16.mxu0 0
  %144 = vmatpush1.bf16.xpose.msra.mxu0 0
  %145 = vmatprep.subr.bf16.mxu0 0
  %146 = vmatpush1.bf16.xpose.msra.mxu0 0
  %147 = vmatprep.subr.bf16.mxu0 0
  %148 = vmatpush1.bf16.xpose.msra.mxu0 %v131
  %149 = vmatprep.subr.bf16.mxu0 0
  %150 = vmatpush2.bf16.xpose.msra.mxu0 0
  %151 = vmatprep.subr.bf16.mxu0 0
  %152 = vmatpush2.bf16.xpose.msra.mxu0 0
  %153 = vmatprep.subr.bf16.mxu0 0
  %154 = vmatpush2.bf16.xpose.msra.mxu0 0
  %155 = vmatprep.subr.bf16.mxu0 0
  %156 = vmatpush2.bf16.xpose.msra.mxu0 0
  %157 = vmatprep.subr.bf16.mxu0 0
  %158 = vmatpush2.bf16.xpose.msra.mxu0 0
  %159 = vmatprep.subr.bf16.mxu0 0
  %160 = vmatpush2.bf16.xpose.msra.mxu0 0
  %161 = vmatprep.subr.bf16.mxu0 0
  %162 = vmatpush2.bf16.xpose.msra.mxu0 0
  %163 = vmatprep.subr.bf16.mxu0 0
  %164 = vmatpush2.bf16.xpose.msra.mxu0 0
  %165 = vmatprep.mubr.bf16.mxu0 0
  %166 = vmatmul.mubr.bf16.gmra.mxu0 %v128
  %v167 = vpop.f32.mrf.mxu0
  %v168 = vadd.f32 0.0, %v167
  %v169 = vpop.f32.mrf.mxu0
  %v170 = vpop.f32.mrf.mxu0
  %v171 = vpop.f32.mrf.mxu0
  %172 = vdwg.mxu0
  %174 = vrot.lane.b32.xlu0 %v122, 96
  %v175 = vpop.permute.xlu0 %174
  %v177 = vsel %vm126, %v122, 0
  %v180 = vsel %vm126, %v175, 0
  %182 = vmatprep.subr.bf16.mxu0 0
  %183 = vmatpush1.bf16.xpose.msra.mxu0 0
  %184 = vmatprep.subr.bf16.mxu0 0
  %185 = vmatpush1.bf16.xpose.msra.mxu0 0
  %186 = vmatprep.subr.bf16.mxu0 0
  %187 = vmatpush1.bf16.xpose.msra.mxu0 0
  %188 = vmatprep.subr.bf16.mxu0 0
  %189 = vmatpush1.bf16.xpose.msra.mxu0 0
  %190 = vmatprep.subr.bf16.mxu0 0
  %191 = vmatpush1.bf16.xpose.msra.mxu0 0
  %192 = vmatprep.subr.bf16.mxu0 0
  %193 = vmatpush1.bf16.xpose.msra.mxu0 0
  %194 = vmatprep.subr.bf16.mxu0 0
  %195 = vmatpush1.bf16.xpose.msra.mxu0 0
  %196 = vmatprep.subr.bf16.mxu0 0
  %197 = vmatpush1.bf16.xpose.msra.mxu0 %v180
  %198 = vmatprep.subr.bf16.mxu0 0
  %199 = vmatpush2.bf16.xpose.msra.mxu0 0
  %200 = vmatprep.subr.bf16.mxu0 0
  %201 = vmatpush2.bf16.xpose.msra.mxu0 0
  %202 = vmatprep.subr.bf16.mxu0 0
  %203 = vmatpush2.bf16.xpose.msra.mxu0 0
  %204 = vmatprep.subr.bf16.mxu0 0
  %205 = vmatpush2.bf16.xpose.msra.mxu0 0
  %206 = vmatprep.subr.bf16.mxu0 0
  %207 = vmatpush2.bf16.xpose.msra.mxu0 0
  %208 = vmatprep.subr.bf16.mxu0 0
  %209 = vmatpush2.bf16.xpose.msra.mxu0 0
  %210 = vmatprep.subr.bf16.mxu0 0
  %211 = vmatpush2.bf16.xpose.msra.mxu0 0
  %212 = vmatprep.subr.bf16.mxu0 0
  %213 = vmatpush2.bf16.xpose.msra.mxu0 0
  %214 = vmatprep.mubr.bf16.mxu0 0
  %215 = vmatmul.mubr.bf16.gmra.mxu0 %v177
  %v216 = vpop.f32.mrf.mxu0
  %v217 = vadd.f32 0.0, %v216
  %v218 = vpop.f32.mrf.mxu0
  %v219 = vpop.f32.mrf.mxu0
  %v220 = vpop.f32.mrf.mxu0
  %221 = vdwg.mxu0
  %v222 = vmul.f32 %v168, 0.25
  %v223 = vmul.f32 %v217, 0.25
  %v226 = vlaneseq
  %v227 = vshrl.u32 %v226, 7
  %v228 = vsub.s32 0, %v227
  %v229 = vrot.slane %v119, %v228
  %v230 = vlaneseq
  %v231 = vshrl.u32 %v230, 7
  %v232 = vsub.s32 0, %v231
  %v233 = vrot.slane %v120, %v232
  %v236 = vadd.f32 %v222, %v229
  %v237 = vadd.f32 %v223, %v233
  %vm238 = vcmask 64512
  %v239 = vsel %vm238, %v236, -inf
  %240 = vmax.xlane.f32.xlu0 %v239
  %v241 = vpop.xlane.xlu0 %240
  %v242 = vsel %vm238, %v237, -inf
  %243 = vmax.xlane.f32.xlu0 %v242
  %v244 = vpop.xlane.xlu0 %243
  %v245 = vsub.f32 %v236, %v241
  %v246 = vsub.f32 %v237, %v244
  %v247 = vmul.f32 %v245, 1.442695
  %v248 = vpow.pop %v247
  %v249 = vmul.f32 %v246, 1.442695
  %v250 = vpow.pop %v249
  %v251 = vsel %vm238, %v248, 0.0
  %252 = vadd.xlane.f32.xlu0 %v251
  %v253 = vpop.xlane.xlu0 %252
  %v254 = vsel %vm238, %v250, 0.0
  %255 = vadd.xlane.f32.xlu0 %v254
  %v256 = vpop.xlane.xlu0 %255
  %v257 = vrcp.pop %v253
  %v258 = vmul.f32 %v248, %v257
  %v259 = vrcp.pop %v256
  %v260 = vmul.f32 %v250, %v259
  %v261 = vpack.c.bf16 %v258, %v258
  %v262 = vpack.c.bf16 %v260, %v260
  %263 = vrot.lane.b32.xlu0 %v121, 64
  %v264 = vpop.permute.xlu0 %263
  %v266 = vsel %vm238, %v261, 0
  %vm268 = vcmask 1043456
  %v270 = vsel %vm268, %v264, 0
  %272 = vmatprep.subr.bf16.mxu0 0
  %273 = vmatpush1.bf16.msra.mxu0 0
  %274 = vmatprep.subr.bf16.mxu0 0
  %275 = vmatpush1.bf16.msra.mxu0 0
  %276 = vmatprep.subr.bf16.mxu0 0
  %277 = vmatpush1.bf16.msra.mxu0 0
  %278 = vmatprep.subr.bf16.mxu0 0
  %279 = vmatpush1.bf16.msra.mxu0 0
  %280 = vmatprep.subr.bf16.mxu0 0
  %281 = vmatpush1.bf16.msra.mxu0 0
  %282 = vmatprep.subr.bf16.mxu0 0
  %283 = vmatpush1.bf16.msra.mxu0 0
  %284 = vmatprep.subr.bf16.mxu0 0
  %285 = vmatpush1.bf16.msra.mxu0 0
  %286 = vmatprep.subr.bf16.mxu0 0
  %287 = vmatpush1.bf16.msra.mxu0 %v270
  %288 = vmatprep.subr.bf16.mxu0 0
  %289 = vmatpush2.bf16.msra.mxu0 0
  %290 = vmatprep.subr.bf16.mxu0 0
  %291 = vmatpush2.bf16.msra.mxu0 0
  %292 = vmatprep.subr.bf16.mxu0 0
  %293 = vmatpush2.bf16.msra.mxu0 0
  %294 = vmatprep.subr.bf16.mxu0 0
  %295 = vmatpush2.bf16.msra.mxu0 0
  %296 = vmatprep.subr.bf16.mxu0 0
  %297 = vmatpush2.bf16.msra.mxu0 0
  %298 = vmatprep.subr.bf16.mxu0 0
  %299 = vmatpush2.bf16.msra.mxu0 0
  %300 = vmatprep.subr.bf16.mxu0 0
  %301 = vmatpush2.bf16.msra.mxu0 0
  %302 = vmatprep.subr.bf16.mxu0 0
  %303 = vmatpush2.bf16.msra.mxu0 0
  %304 = vmatprep.mubr.bf16.mxu0 0
  %305 = vmatmul.mubr.bf16.gmra.mxu0 %v266
  %v306 = vpop.f32.mrf.mxu0
  %v307 = vadd.f32 0.0, %v306
  %v308 = vpop.f32.mrf.mxu0
  %v309 = vpop.f32.mrf.mxu0
  %v310 = vpop.f32.mrf.mxu0
  %311 = vdwg.mxu0
  %312 = vrot.lane.b32.xlu0 %v122, 64
  %v313 = vpop.permute.xlu0 %312
  %v315 = vsel %vm238, %v262, 0
  %v318 = vsel %vm268, %v313, 0
  %320 = vmatprep.subr.bf16.mxu0 0
  %321 = vmatpush1.bf16.msra.mxu0 0
  %322 = vmatprep.subr.bf16.mxu0 0
  %323 = vmatpush1.bf16.msra.mxu0 0
  %324 = vmatprep.subr.bf16.mxu0 0
  %325 = vmatpush1.bf16.msra.mxu0 0
  %326 = vmatprep.subr.bf16.mxu0 0
  %327 = vmatpush1.bf16.msra.mxu0 0
  %328 = vmatprep.subr.bf16.mxu0 0
  %329 = vmatpush1.bf16.msra.mxu0 0
  %330 = vmatprep.subr.bf16.mxu0 0
  %331 = vmatpush1.bf16.msra.mxu0 0
  %332 = vmatprep.subr.bf16.mxu0 0
  %333 = vmatpush1.bf16.msra.mxu0 0
  %334 = vmatprep.subr.bf16.mxu0 0
  %335 = vmatpush1.bf16.msra.mxu0 %v318
  %336 = vmatprep.subr.bf16.mxu0 0
  %337 = vmatpush2.bf16.msra.mxu0 0
  %338 = vmatprep.subr.bf16.mxu0 0
  %339 = vmatpush2.bf16.msra.mxu0 0
  %340 = vmatprep.subr.bf16.mxu0 0
  %341 = vmatpush2.bf16.msra.mxu0 0
  %342 = vmatprep.subr.bf16.mxu0 0
  %343 = vmatpush2.bf16.msra.mxu0 0
  %344 = vmatprep.subr.bf16.mxu0 0
  %345 = vmatpush2.bf16.msra.mxu0 0
  %346 = vmatprep.subr.bf16.mxu0 0
  %347 = vmatpush2.bf16.msra.mxu0 0
  %348 = vmatprep.subr.bf16.mxu0 0
  %349 = vmatpush2.bf16.msra.mxu0 0
  %350 = vmatprep.subr.bf16.mxu0 0
  %351 = vmatpush2.bf16.msra.mxu0 0
  %352 = vmatprep.mubr.bf16.mxu0 0
  %353 = vmatmul.mubr.bf16.gmra.mxu0 %v315
  %v354 = vpop.f32.mrf.mxu0
  %v355 = vadd.f32 0.0, %v354
  %v356 = vpop.f32.mrf.mxu0
  %v357 = vpop.f32.mrf.mxu0
  %v358 = vpop.f32.mrf.mxu0
  %359 = vdwg.mxu0
  %360 = vrot.lane.b32.xlu0 %v121, 112
  %v361 = vpop.permute.xlu0 %360
  %362 = vrot.lane.b32.xlu0 %v121, 80
  %v363 = vpop.permute.xlu0 %362
  %v365 = vsel %vm126, %v361, 0
  %v368 = vsel %vm126, %v363, 0
  %370 = vmatprep.subr.bf16.mxu0 0
  %371 = vmatpush1.bf16.xpose.msra.mxu0 0
  %372 = vmatprep.subr.bf16.mxu0 0
  %373 = vmatpush1.bf16.xpose.msra.mxu0 0
  %374 = vmatprep.subr.bf16.mxu0 0
  %375 = vmatpush1.bf16.xpose.msra.mxu0 0
  %376 = vmatprep.subr.bf16.mxu0 0
  %377 = vmatpush1.bf16.xpose.msra.mxu0 0
  %378 = vmatprep.subr.bf16.mxu0 0
  %379 = vmatpush1.bf16.xpose.msra.mxu0 0
  %380 = vmatprep.subr.bf16.mxu0 0
  %381 = vmatpush1.bf16.xpose.msra.mxu0 0
  %382 = vmatprep.subr.bf16.mxu0 0
  %383 = vmatpush1.bf16.xpose.msra.mxu0 0
  %384 = vmatprep.subr.bf16.mxu0 0
  %385 = vmatpush1.bf16.xpose.msra.mxu0 %v368
  %386 = vmatprep.subr.bf16.mxu0 0
  %387 = vmatpush2.bf16.xpose.msra.mxu0 0
  %388 = vmatprep.subr.bf16.mxu0 0
  %389 = vmatpush2.bf16.xpose.msra.mxu0 0
  %390 = vmatprep.subr.bf16.mxu0 0
  %391 = vmatpush2.bf16.xpose.msra.mxu0 0
  %392 = vmatprep.subr.bf16.mxu0 0
  %393 = vmatpush2.bf16.xpose.msra.mxu0 0
  %394 = vmatprep.subr.bf16.mxu0 0
  %395 = vmatpush2.bf16.xpose.msra.mxu0 0
  %396 = vmatprep.subr.bf16.mxu0 0
  %397 = vmatpush2.bf16.xpose.msra.mxu0 0
  %398 = vmatprep.subr.bf16.mxu0 0
  %399 = vmatpush2.bf16.xpose.msra.mxu0 0
  %400 = vmatprep.subr.bf16.mxu0 0
  %401 = vmatpush2.bf16.xpose.msra.mxu0 0
  %402 = vmatprep.mubr.bf16.mxu0 0
  %403 = vmatmul.mubr.bf16.gmra.mxu0 %v365
  %v404 = vpop.f32.mrf.mxu0
  %v405 = vadd.f32 0.0, %v404
  %v406 = vpop.f32.mrf.mxu0
  %v407 = vpop.f32.mrf.mxu0
  %v408 = vpop.f32.mrf.mxu0
  %409 = vdwg.mxu0
  %410 = vrot.lane.b32.xlu0 %v122, 112
  %v411 = vpop.permute.xlu0 %410
  %412 = vrot.lane.b32.xlu0 %v122, 80
  %v413 = vpop.permute.xlu0 %412
  %v415 = vsel %vm126, %v411, 0
  %v418 = vsel %vm126, %v413, 0
  %420 = vmatprep.subr.bf16.mxu0 0
  %421 = vmatpush1.bf16.xpose.msra.mxu0 0
  %422 = vmatprep.subr.bf16.mxu0 0
  %423 = vmatpush1.bf16.xpose.msra.mxu0 0
  %424 = vmatprep.subr.bf16.mxu0 0
  %425 = vmatpush1.bf16.xpose.msra.mxu0 0
  %426 = vmatprep.subr.bf16.mxu0 0
  %427 = vmatpush1.bf16.xpose.msra.mxu0 0
  %428 = vmatprep.subr.bf16.mxu0 0
  %429 = vmatpush1.bf16.xpose.msra.mxu0 0
  %430 = vmatprep.subr.bf16.mxu0 0
  %431 = vmatpush1.bf16.xpose.msra.mxu0 0
  %432 = vmatprep.subr.bf16.mxu0 0
  %433 = vmatpush1.bf16.xpose.msra.mxu0 0
  %434 = vmatprep.subr.bf16.mxu0 0
  %435 = vmatpush1.bf16.xpose.msra.mxu0 %v418
  %436 = vmatprep.subr.bf16.mxu0 0
  %437 = vmatpush2.bf16.xpose.msra.mxu0 0
  %438 = vmatprep.subr.bf16.mxu0 0
  %439 = vmatpush2.bf16.xpose.msra.mxu0 0
  %440 = vmatprep.subr.bf16.mxu0 0
  %441 = vmatpush2.bf16.xpose.msra.mxu0 0
  %442 = vmatprep.subr.bf16.mxu0 0
  %443 = vmatpush2.bf16.xpose.msra.mxu0 0
  %444 = vmatprep.subr.bf16.mxu0 0
  %445 = vmatpush2.bf16.xpose.msra.mxu0 0
  %446 = vmatprep.subr.bf16.mxu0 0
  %447 = vmatpush2.bf16.xpose.msra.mxu0 0
  %448 = vmatprep.subr.bf16.mxu0 0
  %449 = vmatpush2.bf16.xpose.msra.mxu0 0
  %450 = vmatprep.subr.bf16.mxu0 0
  %451 = vmatpush2.bf16.xpose.msra.mxu0 0
  %452 = vmatprep.mubr.bf16.mxu0 0
  %453 = vmatmul.mubr.bf16.gmra.mxu0 %v415
  %v454 = vpop.f32.mrf.mxu0
  %v455 = vadd.f32 0.0, %v454
  %v456 = vpop.f32.mrf.mxu0
  %v457 = vpop.f32.mrf.mxu0
  %v458 = vpop.f32.mrf.mxu0
  %459 = vdwg.mxu0
  %v460 = vmul.f32 %v405, 0.25
  %v461 = vmul.f32 %v455, 0.25
  %v462 = vadd.f32 %v460, %v229
  %v463 = vadd.f32 %v461, %v233
  %v464 = vsel %vm238, %v462, -inf
  %465 = vmax.xlane.f32.xlu0 %v464
  %v466 = vpop.xlane.xlu0 %465
  %v467 = vsel %vm238, %v463, -inf
  %468 = vmax.xlane.f32.xlu0 %v467
  %v469 = vpop.xlane.xlu0 %468
  %v470 = vsub.f32 %v462, %v466
  %v471 = vsub.f32 %v463, %v469
  %v472 = vmul.f32 %v470, 1.442695
  %v473 = vpow.pop %v472
  %v474 = vmul.f32 %v471, 1.442695
  %v475 = vpow.pop %v474
  %v476 = vsel %vm238, %v473, 0.0
  %477 = vadd.xlane.f32.xlu0 %v476
  %v478 = vpop.xlane.xlu0 %477
  %v479 = vsel %vm238, %v475, 0.0
  %480 = vadd.xlane.f32.xlu0 %v479
  %v481 = vpop.xlane.xlu0 %480
  %v482 = vrcp.pop %v478
  %v483 = vmul.f32 %v473, %v482
  %v484 = vrcp.pop %v481
  %v485 = vmul.f32 %v475, %v484
  %v486 = vpack.c.bf16 %v483, %v483
  %v487 = vpack.c.bf16 %v485, %v485
  %488 = vrot.lane.b32.xlu0 %v121, 48
  %v489 = vpop.permute.xlu0 %488
  %v491 = vsel %vm238, %v486, 0
  %v494 = vsel %vm268, %v489, 0
  %496 = vmatprep.subr.bf16.mxu0 0
  %497 = vmatpush1.bf16.msra.mxu0 0
  %498 = vmatprep.subr.bf16.mxu0 0
  %499 = vmatpush1.bf16.msra.mxu0 0
  %500 = vmatprep.subr.bf16.mxu0 0
  %501 = vmatpush1.bf16.msra.mxu0 0
  %502 = vmatprep.subr.bf16.mxu0 0
  %503 = vmatpush1.bf16.msra.mxu0 0
  %504 = vmatprep.subr.bf16.mxu0 0
  %505 = vmatpush1.bf16.msra.mxu0 0
  %506 = vmatprep.subr.bf16.mxu0 0
  %507 = vmatpush1.bf16.msra.mxu0 0
  %508 = vmatprep.subr.bf16.mxu0 0
  %509 = vmatpush1.bf16.msra.mxu0 0
  %510 = vmatprep.subr.bf16.mxu0 0
  %511 = vmatpush1.bf16.msra.mxu0 %v494
  %512 = vmatprep.subr.bf16.mxu0 0
  %513 = vmatpush2.bf16.msra.mxu0 0
  %514 = vmatprep.subr.bf16.mxu0 0
  %515 = vmatpush2.bf16.msra.mxu0 0
  %516 = vmatprep.subr.bf16.mxu0 0
  %517 = vmatpush2.bf16.msra.mxu0 0
  %518 = vmatprep.subr.bf16.mxu0 0
  %519 = vmatpush2.bf16.msra.mxu0 0
  %520 = vmatprep.subr.bf16.mxu0 0
  %521 = vmatpush2.bf16.msra.mxu0 0
  %522 = vmatprep.subr.bf16.mxu0 0
  %523 = vmatpush2.bf16.msra.mxu0 0
  %524 = vmatprep.subr.bf16.mxu0 0
  %525 = vmatpush2.bf16.msra.mxu0 0
  %526 = vmatprep.subr.bf16.mxu0 0
  %527 = vmatpush2.bf16.msra.mxu0 0
  %528 = vmatprep.mubr.bf16.mxu0 0
  %529 = vmatmul.mubr.bf16.gmra.mxu0 %v491
  %v530 = vpop.f32.mrf.mxu0
  %v531 = vadd.f32 0.0, %v530
  %v532 = vpop.f32.mrf.mxu0
  %v533 = vpop.f32.mrf.mxu0
  %v534 = vpop.f32.mrf.mxu0
  %535 = vdwg.mxu0
  %536 = vrot.lane.b32.xlu0 %v122, 48
  %v537 = vpop.permute.xlu0 %536
  %v539 = vsel %vm238, %v487, 0
  %v542 = vsel %vm268, %v537, 0
  %544 = vmatprep.subr.bf16.mxu0 0
  %545 = vmatpush1.bf16.msra.mxu0 0
  %546 = vmatprep.subr.bf16.mxu0 0
  %547 = vmatpush1.bf16.msra.mxu0 0
  %548 = vmatprep.subr.bf16.mxu0 0
  %549 = vmatpush1.bf16.msra.mxu0 0
  %550 = vmatprep.subr.bf16.mxu0 0
  %551 = vmatpush1.bf16.msra.mxu0 0
  %552 = vmatprep.subr.bf16.mxu0 0
  %553 = vmatpush1.bf16.msra.mxu0 0
  %554 = vmatprep.subr.bf16.mxu0 0
  %555 = vmatpush1.bf16.msra.mxu0 0
  %556 = vmatprep.subr.bf16.mxu0 0
  %557 = vmatpush1.bf16.msra.mxu0 0
  %558 = vmatprep.subr.bf16.mxu0 0
  %559 = vmatpush1.bf16.msra.mxu0 %v542
  %560 = vmatprep.subr.bf16.mxu0 0
  %561 = vmatpush2.bf16.msra.mxu0 0
  %562 = vmatprep.subr.bf16.mxu0 0
  %563 = vmatpush2.bf16.msra.mxu0 0
  %564 = vmatprep.subr.bf16.mxu0 0
  %565 = vmatpush2.bf16.msra.mxu0 0
  %566 = vmatprep.subr.bf16.mxu0 0
  %567 = vmatpush2.bf16.msra.mxu0 0
  %568 = vmatprep.subr.bf16.mxu0 0
  %569 = vmatpush2.bf16.msra.mxu0 0
  %570 = vmatprep.subr.bf16.mxu0 0
  %571 = vmatpush2.bf16.msra.mxu0 0
  %572 = vmatprep.subr.bf16.mxu0 0
  %573 = vmatpush2.bf16.msra.mxu0 0
  %574 = vmatprep.subr.bf16.mxu0 0
  %575 = vmatpush2.bf16.msra.mxu0 0
  %576 = vmatprep.mubr.bf16.mxu0 0
  %577 = vmatmul.mubr.bf16.gmra.mxu0 %v539
  %v578 = vpop.f32.mrf.mxu0
  %v579 = vadd.f32 0.0, %v578
  %v580 = vpop.f32.mrf.mxu0
  %v581 = vpop.f32.mrf.mxu0
  %v582 = vpop.f32.mrf.mxu0
  %583 = vdwg.mxu0
  %586 = vrot.lane.b32.xlu0 %v531, 16
  %v587 = vpop.permute.xlu0 %586
  %588 = vrot.lane.b32.xlu0 %v579, 16
  %v589 = vpop.permute.xlu0 %588
  %v592 = vsel %vm126, %v307, %v587
  %v593 = vsel %vm126, %v355, %v589
  %v594 = vpack.c.bf16 %v593, %v592
  %v595 = vld [vmem:[%s4] sm:$0xf]
  %v596 = vld [vmem:[%s4 + $0x4] sm:$0xf]
  %v597 = vld [vmem:[%s4 + $0x8] sm:$0xf]
  %v598 = vld [vmem:[%s4 + $0xc] sm:$0xf]
  %v599 = vld [vmem:[%s5] sm:$0x1]
  %v601 = vlaneseq
  %v602 = vshrl.u32 %v601, 7
  %v603 = vsub.s32 0, %v602
  %v604 = vrot.slane %v599, %v603
  %v610 = vunpack.c.l.b16 %v595
  %v611 = vunpack.c.l.b16 %v596
  %v612 = vunpack.c.l.b16 %v597
  %v613 = vunpack.c.l.b16 %v598
  %v614 = vpack.c.b16 %v611, %v610
  %v615 = vpack.c.b16 %v613, %v612
  %v619 = vsel %vm74, %v594, 0
  %621 = vmatprep.subr.bf16.mxu0 0
  %622 = vmatpush1.bf16.msra.mxu0 0
  %623 = vmatprep.subr.bf16.mxu0 0
  %624 = vmatpush1.bf16.msra.mxu0 0
  %625 = vmatprep.subr.bf16.mxu0 0
  %626 = vmatpush1.bf16.msra.mxu0 0
  %627 = vmatprep.subr.bf16.mxu0 0
  %628 = vmatpush1.bf16.msra.mxu0 0
  %629 = vmatprep.subr.bf16.mxu0 0
  %630 = vmatpush1.bf16.msra.mxu0 0
  %631 = vmatprep.subr.bf16.mxu0 0
  %632 = vmatpush1.bf16.msra.mxu0 0
  %633 = vmatprep.subr.bf16.mxu0 0
  %634 = vmatpush1.bf16.msra.mxu0 %v615
  %635 = vmatprep.subr.bf16.mxu0 0
  %636 = vmatpush1.bf16.msra.mxu0 %v614
  %637 = vmatprep.subr.bf16.mxu0 0
  %638 = vmatpush2.bf16.msra.mxu0 0
  %639 = vmatprep.subr.bf16.mxu0 0
  %640 = vmatpush2.bf16.msra.mxu0 0
  %641 = vmatprep.subr.bf16.mxu0 0
  %642 = vmatpush2.bf16.msra.mxu0 0
  %643 = vmatprep.subr.bf16.mxu0 0
  %644 = vmatpush2.bf16.msra.mxu0 0
  %645 = vmatprep.subr.bf16.mxu0 0
  %646 = vmatpush2.bf16.msra.mxu0 0
  %647 = vmatprep.subr.bf16.mxu0 0
  %648 = vmatpush2.bf16.msra.mxu0 0
  %649 = vmatprep.subr.bf16.mxu0 0
  %650 = vmatpush2.bf16.msra.mxu0 0
  %651 = vmatprep.subr.bf16.mxu0 0
  %652 = vmatpush2.bf16.msra.mxu0 0
  %653 = vmatprep.mubr.bf16.mxu0 0
  %654 = vmatmul.mubr.bf16.gmra.mxu0 %v619
  %v655 = vpop.f32.mrf.mxu0
  %v656 = vadd.f32 %v604, %v655
  %v657 = vpop.f32.mrf.mxu0
  %v658 = vpop.f32.mrf.mxu0
  %v659 = vadd.f32 %v604, %v658
  %v660 = vpop.f32.mrf.mxu0
  %661 = vdwg.mxu0
  %v662 = vadd.f32 %v48, %v656
  %v663 = vadd.f32 %v49, %v659
  %v664 = vld [vmem:[%s6] sm:$0x1]
  %v665 = vld [vmem:[%s7] sm:$0x1]
  %v666 = vsel %vm74, %v662, 0.0
  %667 = vadd.xlane.f32.xlu0 %v666
  %v668 = vpop.xlane.xlu0 %667
  %v669 = vsel %vm74, %v663, 0.0
  %670 = vadd.xlane.f32.xlu0 %v669
  %v671 = vpop.xlane.xlu0 %670
  %v672 = vrcp.pop 32.0
  %v673 = vmul.f32 %v668, %v672
  %v674 = vmul.f32 %v671, %v672
  %v675 = vsub.f32 %v662, %v673
  %v676 = vsub.f32 %v663, %v674
  %v677 = vmul.f32 %v675, %v675
  %v678 = vmul.f32 %v676, %v676
  %v679 = vsel %vm74, %v677, 0.0
  %680 = vadd.xlane.f32.xlu0 %v679
  %v681 = vpop.xlane.xlu0 %680
  %v682 = vsel %vm74, %v678, 0.0
  %683 = vadd.xlane.f32.xlu0 %v682
  %v684 = vpop.xlane.xlu0 %683
  %v685 = vmul.f32 %v681, %v672
  %v686 = vmul.f32 %v684, %v672
  %v687 = vadd.f32 %v685, 1e-12
  %v688 = vadd.f32 %v686, 1e-12
  %v689 = vrsqrt.pop %v687
  %v690 = vrsqrt.pop %v688
  %v691 = vmul.f32 %v675, %v689
  %v692 = vmul.f32 %v676, %v690
  %v694 = vlaneseq
  %v695 = vshrl.u32 %v694, 7
  %v696 = vsub.s32 0, %v695
  %v697 = vrot.slane %v664, %v696
  %v699 = vmul.f32 %v691, %v697
  %v700 = vmul.f32 %v692, %v697
  %v702 = vlaneseq
  %v703 = vshrl.u32 %v702, 7
  %v704 = vsub.s32 0, %v703
  %v705 = vrot.slane %v665, %v704
  %v707 = vadd.f32 %v699, %v705
  %v708 = vadd.f32 %v700, %v705
  %v709 = vpack.c.bf16 %v708, %v707
  %v710 = vld [vmem:[%s8] sm:$0xf]
  %v711 = vld [vmem:[%s8 + $0x4] sm:$0xf]
  %v712 = vld [vmem:[%s8 + $0x8] sm:$0xf]
  %v713 = vld [vmem:[%s8 + $0xc] sm:$0xf]
  %v714 = vld [vmem:[%s9] sm:$0x1]
  %v716 = vlaneseq
  %v717 = vshrl.u32 %v716, 7
  %v718 = vsub.s32 0, %v717
  %v719 = vrot.slane %v714, %v718
  %v725 = vunpack.c.l.b16 %v710
  %v726 = vunpack.c.l.b16 %v711
  %v727 = vunpack.c.l.b16 %v712
  %v728 = vunpack.c.l.b16 %v713
  %v729 = vpack.c.b16 %v726, %v725
  %v730 = vpack.c.b16 %v728, %v727
  %v734 = vsel %vm74, %v709, 0
  %736 = vmatprep.subr.bf16.mxu0 0
  %737 = vmatpush1.bf16.msra.mxu0 0
  %738 = vmatprep.subr.bf16.mxu0 0
  %739 = vmatpush1.bf16.msra.mxu0 0
  %740 = vmatprep.subr.bf16.mxu0 0
  %741 = vmatpush1.bf16.msra.mxu0 0
  %742 = vmatprep.subr.bf16.mxu0 0
  %743 = vmatpush1.bf16.msra.mxu0 0
  %744 = vmatprep.subr.bf16.mxu0 0
  %745 = vmatpush1.bf16.msra.mxu0 0
  %746 = vmatprep.subr.bf16.mxu0 0
  %747 = vmatpush1.bf16.msra.mxu0 0
  %748 = vmatprep.subr.bf16.mxu0 0
  %749 = vmatpush1.bf16.msra.mxu0 %v730
  %750 = vmatprep.subr.bf16.mxu0 0
  %751 = vmatpush1.bf16.msra.mxu0 %v729
  %752 = vmatprep.subr.bf16.mxu0 0
  %753 = vmatpush2.bf16.msra.mxu0 0
  %754 = vmatprep.subr.bf16.mxu0 0
  %755 = vmatpush2.bf16.msra.mxu0 0
  %756 = vmatprep.subr.bf16.mxu0 0
  %757 = vmatpush2.bf16.msra.mxu0 0
  %758 = vmatprep.subr.bf16.mxu0 0
  %759 = vmatpush2.bf16.msra.mxu0 0
  %760 = vmatprep.subr.bf16.mxu0 0
  %761 = vmatpush2.bf16.msra.mxu0 0
  %762 = vmatprep.subr.bf16.mxu0 0
  %763 = vmatpush2.bf16.msra.mxu0 0
  %764 = vmatprep.subr.bf16.mxu0 0
  %765 = vmatpush2.bf16.msra.mxu0 0
  %766 = vmatprep.subr.bf16.mxu0 0
  %767 = vmatpush2.bf16.msra.mxu0 0
  %768 = vmatprep.mubr.bf16.mxu0 0
  %769 = vmatmul.mubr.bf16.gmra.mxu0 %v734
  %v770 = vpop.f32.mrf.mxu0
  %v771 = vadd.f32 %v719, %v770
  %v772 = vpop.f32.mrf.mxu0
  %v773 = vpop.f32.mrf.mxu0
  %v774 = vadd.f32 %v719, %v773
  %v775 = vpop.f32.mrf.mxu0
  %776 = vdwg.mxu0
  %v777 = vmul.f32 %v771, %v771
  %v778 = vmul.f32 %v774, %v774
  %v779 = vmul.f32 %v771, %v777
  %v780 = vmul.f32 %v774, %v778
  %v781 = vmul.f32 %v779, 0.044715
  %v782 = vmul.f32 %v780, 0.044715
  %v783 = vadd.f32 %v771, %v781
  %v784 = vadd.f32 %v774, %v782
  %v785 = vmul.f32 %v783, 0.7978846
  %v786 = vmul.f32 %v784, 0.7978846
  %v787 = vtanh.pop %v785
  %v788 = vtanh.pop %v786
  %v789 = vadd.f32 %v787, 1.0
  %v790 = vadd.f32 %v788, 1.0
  %v791 = vmul.f32 %v789, 0.5
  %v792 = vmul.f32 %v790, 0.5
  %v793 = vmul.f32 %v771, %v791
  %v794 = vmul.f32 %v774, %v792
  %v795 = vpack.c.bf16 %v794, %v793
  %v796 = vld [vmem:[%s10] sm:$0xf]
  %v797 = vld [vmem:[%s10 + $0x4] sm:$0xf]
  %v798 = vld [vmem:[%s10 + $0x8] sm:$0xf]
  %v799 = vld [vmem:[%s10 + $0xc] sm:$0xf]
  %v800 = vld [vmem:[%s10 + $0x10] sm:$0xf]
  %v801 = vld [vmem:[%s10 + $0x14] sm:$0xf]
  %v802 = vld [vmem:[%s10 + $0x18] sm:$0xf]
  %v803 = vld [vmem:[%s10 + $0x1c] sm:$0xf]
  %v804 = vld [vmem:[%s10 + $0x20] sm:$0xf]
  %v805 = vld [vmem:[%s10 + $0x24] sm:$0xf]
  %v806 = vld [vmem:[%s10 + $0x28] sm:$0xf]
  %v807 = vld [vmem:[%s10 + $0x2c] sm:$0xf]
  %v808 = vld [vmem:[%s10 + $0x30] sm:$0xf]
  %v809 = vld [vmem:[%s10 + $0x34] sm:$0xf]
  %v810 = vld [vmem:[%s10 + $0x38] sm:$0xf]
  %v811 = vld [vmem:[%s10 + $0x3c] sm:$0xf]
  %v812 = vld [vmem:[%s11] sm:$0x1]
  %v814 = vlaneseq
  %v815 = vshrl.u32 %v814, 7
  %v816 = vsub.s32 0, %v815
  %v817 = vrot.slane %v812, %v816
  %v835 = vunpack.c.l.b16 %v796
  %v836 = vunpack.c.l.b16 %v797
  %v837 = vunpack.c.l.b16 %v798
  %v838 = vunpack.c.l.b16 %v799
  %v839 = vunpack.c.l.b16 %v800
  %v840 = vunpack.c.l.b16 %v801
  %v841 = vunpack.c.l.b16 %v802
  %v842 = vunpack.c.l.b16 %v803
  %v843 = vunpack.c.l.b16 %v804
  %v844 = vunpack.c.l.b16 %v805
  %v845 = vunpack.c.l.b16 %v806
  %v846 = vunpack.c.l.b16 %v807
  %v847 = vunpack.c.l.b16 %v808
  %v848 = vunpack.c.l.b16 %v809
  %v849 = vunpack.c.l.b16 %v810
  %v850 = vunpack.c.l.b16 %v811
  %v851 = vpack.c.b16 %v836, %v835
  %v852 = vpack.c.b16 %v838, %v837
  %v853 = vpack.c.b16 %v840, %v839
  %v854 = vpack.c.b16 %v842, %v841
  %v855 = vpack.c.b16 %v844, %v843
  %v856 = vpack.c.b16 %v846, %v845
  %v857 = vpack.c.b16 %v848, %v847
  %v858 = vpack.c.b16 %v850, %v849
  %867 = vmatprep.subr.bf16.mxu0 0
  %868 = vmatpush1.bf16.msra.mxu0 %v858
  %869 = vmatprep.subr.bf16.mxu0 0
  %870 = vmatpush1.bf16.msra.mxu0 %v857
  %871 = vmatprep.subr.bf16.mxu0 0
  %872 = vmatpush1.bf16.msra.mxu0 %v856
  %873 = vmatprep.subr.bf16.mxu0 0
  %874 = vmatpush1.bf16.msra.mxu0 %v855
  %875 = vmatprep.subr.bf16.mxu0 0
  %876 = vmatpush1.bf16.msra.mxu0 %v854
  %877 = vmatprep.subr.bf16.mxu0 0
  %878 = vmatpush1.bf16.msra.mxu0 %v853
  %879 = vmatprep.subr.bf16.mxu0 0
  %880 = vmatpush1.bf16.msra.mxu0 %v852
  %881 = vmatprep.subr.bf16.mxu0 0
  %882 = vmatpush1.bf16.msra.mxu0 %v851
  %883 = vmatprep.subr.bf16.mxu0 0
  %884 = vmatpush2.bf16.msra.mxu0 0
  %885 = vmatprep.subr.bf16.mxu0 0
  %886 = vmatpush2.bf16.msra.mxu0 0
  %887 = vmatprep.subr.bf16.mxu0 0
  %888 = vmatpush2.bf16.msra.mxu0 0
  %889 = vmatprep.subr.bf16.mxu0 0
  %890 = vmatpush2.bf16.msra.mxu0 0
  %891 = vmatprep.subr.bf16.mxu0 0
  %892 = vmatpush2.bf16.msra.mxu0 0
  %893 = vmatprep.subr.bf16.mxu0 0
  %894 = vmatpush2.bf16.msra.mxu0 0
  %895 = vmatprep.subr.bf16.mxu0 0
  %896 = vmatpush2.bf16.msra.mxu0 0
  %897 = vmatprep.subr.bf16.mxu0 0
  %898 = vmatpush2.bf16.msra.mxu0 0
  %899 = vmatprep.mubr.bf16.mxu0 0
  %900 = vmatmul.mubr.bf16.gmra.mxu0 %v795
  %v901 = vpop.f32.mrf.mxu0
  %v902 = vadd.f32 %v817, %v901
  %v903 = vpop.f32.mrf.mxu0
  %v904 = vpop.f32.mrf.mxu0
  %v905 = vadd.f32 %v817, %v904
  %v906 = vpop.f32.mrf.mxu0
  %907 = vdwg.mxu0
  %v908 = vadd.f32 %v707, %v902
  %v909 = vadd.f32 %v708, %v905
  %v910 = vld [vmem:[%s12] sm:$0x1]
  %v911 = vld [vmem:[%s13] sm:$0x1]
  %v912 = vsel %vm74, %v908, 0.0
  %913 = vadd.xlane.f32.xlu0 %v912
  %v914 = vpop.xlane.xlu0 %913
  %v915 = vsel %vm74, %v909, 0.0
  %916 = vadd.xlane.f32.xlu0 %v915
  %v917 = vpop.xlane.xlu0 %916
  %v918 = vmul.f32 %v914, %v672
  %v919 = vmul.f32 %v917, %v672
  %v920 = vsub.f32 %v908, %v918
  %v921 = vsub.f32 %v909, %v919
  %v922 = vmul.f32 %v920, %v920
  %v923 = vmul.f32 %v921, %v921
  %v924 = vsel %vm74, %v922, 0.0
  %925 = vadd.xlane.f32.xlu0 %v924
  %v926 = vpop.xlane.xlu0 %925
  %v927 = vsel %vm74, %v923, 0.0
  %928 = vadd.xlane.f32.xlu0 %v927
  %v929 = vpop.xlane.xlu0 %928
  %v930 = vmul.f32 %v926, %v672
  %v931 = vmul.f32 %v929, %v672
  %v932 = vadd.f32 %v930, 1e-12
  %v933 = vadd.f32 %v931, 1e-12
  %v934 = vrsqrt.pop %v932
  %v935 = vrsqrt.pop %v933
  %v936 = vmul.f32 %v920, %v934
  %v937 = vmul.f32 %v921, %v935
  %v939 = vlaneseq
  %v940 = vshrl.u32 %v939, 7
  %v941 = vsub.s32 0, %v940
  %v942 = vrot.slane %v910, %v941
  %v944 = vmul.f32 %v936, %v942
  %v945 = vmul.f32 %v937, %v942
  %v947 = vlaneseq
  %v948 = vshrl.u32 %v947, 7
  %v949 = vsub.s32 0, %v948
  %v950 = vrot.slane %v911, %v949
  %v952 = vadd.f32 %v944, %v950
  %v953 = vadd.f32 %v945, %v950
  %954 = vst.msk [vmem:[%s14] sm:$0xff] %vm74, %v952
  %955 = vst.msk [vmem:[%s14 + $0x8] sm:$0xff] %vm74, %v953
  // Predicated region
  $region58: #{bert_forward.5} parent=0 // pred_check
    _
  $region59: #{bert_forward.5} parent=0 // pred_check_branch
    %957 = sbr.rel (0) target = $region61
  $region60: #{bert_forward.5} parent=0 // pred_region
    _
  $region61: #{bert_forward.5} parent=0 // pred_fallthru
    _
  // Predicated region
  $region62: #{bert_forward.5} parent=0 // pred_check
    _
  $region63: #{bert_forward.5} parent=0 // pred_check_branch
    %959 = sbr.rel (0) target = $region65
  $region64: #{bert_forward.5} parent=0 // pred_region
    _
  $region65: #{bert_forward.5} parent=0 // pred_fallthru
    _

</llo_original>
